<compile_context>
chip_gen: v6e
topology: v6e:2x2x1
jax: 0.10.0
libtpu: 0.0.40
codegen_flags: <defaults>
</compile_context>

<pallas_src>
import jax
import jax.numpy as jnp
from jax.experimental import pallas as pl
from jax.experimental.pallas import tpu as pltpu


def _node_pred_kernel(x_ref, w1_ref, b1_ref, w2_ref, b2_ref, gsum_ref, o_ref):
    # x_ref:    (tile_g, pack*in_dim)   bf16   (pack nodes packed per slab row)
    # w1_ref:   (pack*in_dim, pack*fc1) bf16   = kron(I_pack, W1)
    # b1_ref:   (1, pack*fc1)           f32
    # w2_ref:   (pack*fc1, 128)         bf16   = kron(I_pack, W2)
    # b2_ref:   (1, 128)                f32
    # gsum_ref: (128, 128)              bf16   = kron(I_pack, ones(fc2, fc2))
    # o_ref:    (tile_g, 128)           f32    (pack softmax rows per slab row)

    # fc1 + bias + relu (bf16 MXU inputs, f32 accumulate, f32 elementwise).
    h = jnp.dot(x_ref[...], w1_ref[...], preferred_element_type=jnp.float32)
    h = jnp.maximum(h + b1_ref[...], 0.0)

    # fc2 + bias.
    z = jnp.dot(h.astype(w2_ref.dtype), w2_ref[...],
                preferred_element_type=jnp.float32) + b2_ref[...]

    # Softmax over every group of fc2 lanes (one node's classes).
    # Shift by the per-slab-row max: it is constant within each group, so the
    # softmax value is unchanged (shift invariance) and z - m <= 0 everywhere.
    # TODO(synk): a true per-group max would additionally protect the pathological
    # case where two nodes in the same slab row have logits > ~88 apart.
    m = jnp.max(z, axis=1, keepdims=True)
    e = jnp.exp(z - m)

    # Per-group sums broadcast back to every lane of the group via a matmul with
    # the block-diagonal 0/1 matrix.  Split e into bf16 hi/lo parts so the bf16
    # MXU path still yields an ~f32-accurate denominator (keeps the row-sum==1
    # property to ~1e-6 instead of ~2e-3 for a single bf16 pass).
    e_hi = e.astype(jnp.bfloat16)
    e_lo = (e - e_hi.astype(jnp.float32)).astype(jnp.bfloat16)
    denom = (jnp.dot(e_hi, gsum_ref[...], preferred_element_type=jnp.float32)
             + jnp.dot(e_lo, gsum_ref[...], preferred_element_type=jnp.float32))

    o_ref[...] = (e * pl.reciprocal(denom, approx=False)).astype(o_ref.dtype)


def node_prediction_forward(x, w1, b1, w2, b2, *, tile_g=1024):
    """Eval-mode NodePredictionModel forward.

    x:  (N, in_dim) f32 node features (in_dim = multiplier * layer_2_dim)
    w1: (in_dim, fc1), b1: (fc1,)   -- fc1 Linear, weight already laid out [in, out]
    w2: (fc1, fc2),    b2: (fc2,)   -- fc2 Linear, weight already laid out [in, out]
    returns (N, fc2) f32 softmax probabilities.
    """
    n, in_dim = x.shape
    fc1 = w1.shape[1]
    fc2 = w2.shape[1]
    if 128 % fc2 != 0:
        raise NotImplementedError("packed-output path assumes fc_2_dim divides 128")
    pack = 128 // fc2                       # nodes packed per 128-lane slab row

    # Pad N so it splits into whole (8-sublane aligned) slab rows and whole tiles.
    g = pl.cdiv(n, pack)                    # slab rows needed
    g_aligned = pl.cdiv(g, 8) * 8           # keep every tile (8,128)-aligned
    tile_g = max(8, min(tile_g, g_aligned))  # tile_g slab rows = tile_g*pack nodes / step
    g_pad = pl.cdiv(g, tile_g) * tile_g
    n_pad = g_pad * pack
    x_pad = jnp.pad(x.astype(jnp.float32), ((0, n_pad - n), (0, 0)))

    # Lane-dense packing + bf16 MXU inputs.  (pad+reshape+cast fuse into a single
    # XLA pass over x; in a real model the packed/bf16 weights below would be
    # prepared once, outside the per-call path.)
    x_packed = x_pad.reshape(g_pad, pack * in_dim).astype(jnp.bfloat16)
    eye = jnp.eye(pack, dtype=jnp.float32)
    w1_blk = jnp.kron(eye, w1.astype(jnp.float32)).astype(jnp.bfloat16)   # (pack*in, pack*fc1)
    w2_blk = jnp.kron(eye, w2.astype(jnp.float32)).astype(jnp.bfloat16)   # (pack*fc1, 128)
    gsum = jnp.kron(eye, jnp.ones((fc2, fc2), jnp.float32)).astype(jnp.bfloat16)
    b1_tiled = jnp.tile(b1.astype(jnp.float32), pack).reshape(1, pack * fc1)
    b2_tiled = jnp.tile(b2.astype(jnp.float32), pack).reshape(1, pack * fc2)

    cost = pl.CostEstimate(
        flops=2 * g_pad * (pack * in_dim * pack * fc1 + pack * fc1 * 128 + 2 * 128 * 128),
        transcendentals=g_pad * 128,
        bytes_accessed=(x_packed.size * 2 + w1_blk.size * 2 + w2_blk.size * 2
                        + gsum.size * 2 + b1_tiled.size * 4 + b2_tiled.size * 4
                        + g_pad * 128 * 4),
    )

    out_slab = pl.pallas_call(
        _node_pred_kernel,
        out_shape=jax.ShapeDtypeStruct((g_pad, 128), jnp.float32),
        grid=(g_pad // tile_g,),
        in_specs=[
            pl.BlockSpec((tile_g, pack * in_dim), lambda i: (i, 0)),      # x: streamed
            pl.BlockSpec((pack * in_dim, pack * fc1), lambda i: (0, 0)),  # W1 resident
            pl.BlockSpec((1, pack * fc1), lambda i: (0, 0)),              # b1 resident
            pl.BlockSpec((pack * fc1, 128), lambda i: (0, 0)),            # W2 resident
            pl.BlockSpec((1, 128), lambda i: (0, 0)),                     # b2 resident
            pl.BlockSpec((128, 128), lambda i: (0, 0)),                   # gsum resident
        ],
        out_specs=pl.BlockSpec((tile_g, 128), lambda i: (i, 0)),
        compiler_params=pltpu.CompilerParams(
            dimension_semantics=("parallel",),
            vmem_limit_bytes=32 * 1024 * 1024),
        cost_estimate=cost,
    )(x_packed, w1_blk, b1_tiled, w2_blk, b2_tiled, gsum)

    # Unpack the lane-dense slab back to (N, fc2) outside the kernel (cheap XLA reshape).
    return out_slab.reshape(n_pad, fc2)[:n]


def reference_forward_bf16(x, w1, b1, w2, b2):
    # Mirrors the kernel's bf16-input / f32-accumulate matmuls.
    h = jnp.dot(x.astype(jnp.bfloat16), w1.astype(jnp.bfloat16),
                preferred_element_type=jnp.float32) + b1
    h = jnp.maximum(h, 0.0)
    z = jnp.dot(h.astype(jnp.bfloat16), w2.astype(jnp.bfloat16),
                preferred_element_type=jnp.float32) + b2
    return jax.nn.softmax(z, axis=1)


def reference_forward_f32(x, w1, b1, w2, b2):
    h = jnp.maximum(x @ w1 + b1, 0.0)
    return jax.nn.softmax(h @ w2 + b2, axis=1)


if __name__ == "__main__":
    # args: skipfeats=False -> multiplier=1, layer_2_dim=32, fc_1_dim=64, fc_2_dim=8
    N = 40               # not a multiple of 16 -> exercises padding + unpack slicing
    layer_2_dim = 32
    fc_1_dim = 64
    fc_2_dim = 8
    in_dim = 1 * layer_2_dim

    key = jax.random.PRNGKey(0)
    kx, kw1, kb1, kw2, kb2 = jax.random.split(key, 5)

    x = jax.random.normal(kx, (N, in_dim), dtype=jnp.float32)
    # PyTorch Linear stores weight as [out, in]; we build [in, out] directly
    # (the transpose), which is what y = x @ W.T + b consumes.
    w1 = jax.random.normal(kw1, (in_dim, fc_1_dim), dtype=jnp.float32) * 0.1
    b1 = jax.random.normal(kb1, (fc_1_dim,), dtype=jnp.float32) * 0.1
    w2 = jax.random.normal(kw2, (fc_1_dim, fc_2_dim), dtype=jnp.float32) * 0.1
    b2 = jax.random.normal(kb2, (fc_2_dim,), dtype=jnp.float32) * 0.1

    out = node_prediction_forward(x, w1, b1, w2, b2)
    out = jax.block_until_ready(out)
    assert out.shape == (N, fc_2_dim)
    assert bool(jnp.all(jnp.isfinite(out)))

    ref_bf16 = reference_forward_bf16(x, w1, b1, w2, b2)
    ref_f32 = reference_forward_f32(x, w1, b1, w2, b2)
    assert jnp.allclose(out, ref_bf16, atol=1e-3, rtol=1e-2), "mismatch vs bf16-matched reference"
    assert jnp.allclose(out, ref_f32, atol=3e-2, rtol=3e-2), "mismatch vs f32 reference"
    assert jnp.allclose(jnp.sum(out, axis=1), 1.0, atol=1e-3), "softmax rows must sum to 1"

    print("KERNEL_OK")
</pallas_src>

<mosaic_0001>
module attributes {stable_mosaic.version = 11 : i64} {
  func.func @_node_pred_kernel(%arg0: i32, %arg1: memref<8x512xbf16, #tpu.memory_space<vmem>>, %arg2: memref<512x1024xbf16, #tpu.memory_space<vmem>>, %arg3: memref<1x1024xf32, #tpu.memory_space<vmem>>, %arg4: memref<1024x128xbf16, #tpu.memory_space<vmem>>, %arg5: memref<1x128xf32, #tpu.memory_space<vmem>>, %arg6: memref<128x128xbf16, #tpu.memory_space<vmem>>, %arg7: memref<8x128xf32, #tpu.memory_space<vmem>>) attributes {dimension_semantics = [#tpu.dimension_semantics<parallel>], iteration_bounds = array<i64: 1>, scalar_prefetch = 0 : i64, scratch_operands = 0 : i64, tpu.core_type = #tpu.core_type<tc>, window_params = [{transform_indices = @transform_0, window_bounds = array<i64: 8, 512>}, {pipeline_mode = #tpu.pipeline_mode<synchronous>, transform_indices = @transform_1, window_bounds = array<i64: 512, 1024>}, {pipeline_mode = #tpu.pipeline_mode<synchronous>, transform_indices = @transform_2, window_bounds = array<i64: 1, 1024>}, {pipeline_mode = #tpu.pipeline_mode<synchronous>, transform_indices = @transform_3, window_bounds = array<i64: 1024, 128>}, {pipeline_mode = #tpu.pipeline_mode<synchronous>, transform_indices = @transform_4, window_bounds = array<i64: 1, 128>}, {pipeline_mode = #tpu.pipeline_mode<synchronous>, transform_indices = @transform_5, window_bounds = array<i64: 128, 128>}, {transform_indices = @transform_6, window_bounds = array<i64: 8, 128>}]} {
    %c0 = arith.constant 0 : index
    %c0_0 = arith.constant 0 : index
    %0 = vector.load %arg1[%c0, %c0_0] : memref<8x512xbf16, #tpu.memory_space<vmem>>, vector<8x512xbf16>
    %c0_1 = arith.constant 0 : index
    %c0_2 = arith.constant 0 : index
    %1 = vector.load %arg2[%c0_1, %c0_2] : memref<512x1024xbf16, #tpu.memory_space<vmem>>, vector<512x1024xbf16>
    %cst = arith.constant dense<0.000000e+00> : vector<8x1024xf32>
    %2 = tpu.matmul %0, %1, %cst {dimension_numbers = #tpu.dot_dimension_numbers<[1], [0], [0], [1], [0, 0, 1, 1], [], []>} : vector<8x512xbf16>, vector<512x1024xbf16>, vector<8x1024xf32> -> vector<8x1024xf32>
    %c0_3 = arith.constant 0 : index
    %c0_4 = arith.constant 0 : index
    %3 = vector.load %arg3[%c0_3, %c0_4] : memref<1x1024xf32, #tpu.memory_space<vmem>>, vector<1x1024xf32>
    %4 = vector.broadcast %3 : vector<1x1024xf32> to vector<8x1024xf32>
    %5 = arith.addf %2, %4 : vector<8x1024xf32>
    %cst_5 = arith.constant 0.000000e+00 : f32
    %6 = vector.broadcast %cst_5 : f32 to vector<8x1024xf32>
    %7 = arith.maximumf %5, %6 : vector<8x1024xf32>
    %8 = arith.truncf %7 : vector<8x1024xf32> to vector<8x1024xbf16>
    %c0_6 = arith.constant 0 : index
    %c0_7 = arith.constant 0 : index
    %9 = vector.load %arg4[%c0_6, %c0_7] : memref<1024x128xbf16, #tpu.memory_space<vmem>>, vector<1024x128xbf16>
    %cst_8 = arith.constant dense<0.000000e+00> : vector<8x128xf32>
    %10 = tpu.matmul %8, %9, %cst_8 {dimension_numbers = #tpu.dot_dimension_numbers<[1], [0], [0], [1], [0, 0, 1, 1], [], []>} : vector<8x1024xbf16>, vector<1024x128xbf16>, vector<8x128xf32> -> vector<8x128xf32>
    %c0_9 = arith.constant 0 : index
    %c0_10 = arith.constant 0 : index
    %11 = vector.load %arg5[%c0_9, %c0_10] : memref<1x128xf32, #tpu.memory_space<vmem>>, vector<1x128xf32>
    %12 = vector.broadcast %11 : vector<1x128xf32> to vector<8x128xf32>
    %13 = arith.addf %10, %12 : vector<8x128xf32>
    %cst_11 = arith.constant dense<0xFF800000> : vector<8xf32>
    %14 = vector.multi_reduction <maximumf>, %13, %cst_11 [1] : vector<8x128xf32> to vector<8xf32>
    %15 = vector.shape_cast %14 : vector<8xf32> to vector<8x1xf32>
    %16 = vector.broadcast %15 : vector<8x1xf32> to vector<8x128xf32>
    %17 = arith.subf %13, %16 : vector<8x128xf32>
    %18 = math.exp %17 : vector<8x128xf32>
    %19 = arith.truncf %18 : vector<8x128xf32> to vector<8x128xbf16>
    %20 = arith.extf %19 : vector<8x128xbf16> to vector<8x128xf32>
    %21 = arith.subf %18, %20 : vector<8x128xf32>
    %22 = arith.truncf %21 : vector<8x128xf32> to vector<8x128xbf16>
    %c0_12 = arith.constant 0 : index
    %c0_13 = arith.constant 0 : index
    %23 = vector.load %arg6[%c0_12, %c0_13] : memref<128x128xbf16, #tpu.memory_space<vmem>>, vector<128x128xbf16>
    %cst_14 = arith.constant dense<0.000000e+00> : vector<8x128xf32>
    %24 = tpu.matmul %19, %23, %cst_14 {dimension_numbers = #tpu.dot_dimension_numbers<[1], [0], [0], [1], [0, 0, 1, 1], [], []>} : vector<8x128xbf16>, vector<128x128xbf16>, vector<8x128xf32> -> vector<8x128xf32>
    %c0_15 = arith.constant 0 : index
    %c0_16 = arith.constant 0 : index
    %25 = vector.load %arg6[%c0_15, %c0_16] : memref<128x128xbf16, #tpu.memory_space<vmem>>, vector<128x128xbf16>
    %cst_17 = arith.constant dense<0.000000e+00> : vector<8x128xf32>
    %26 = tpu.matmul %22, %25, %cst_17 {dimension_numbers = #tpu.dot_dimension_numbers<[1], [0], [0], [1], [0, 0, 1, 1], [], []>} : vector<8x128xbf16>, vector<128x128xbf16>, vector<8x128xf32> -> vector<8x128xf32>
    %27 = arith.addf %24, %26 : vector<8x128xf32>
    %28 = tpu.reciprocal %27 : vector<8x128xf32> -> vector<8x128xf32>
    %29 = arith.mulf %18, %28 : vector<8x128xf32>
    %c0_18 = arith.constant 0 : index
    %c0_19 = arith.constant 0 : index
    %30 = vector.load %arg7[%c0_18, %c0_19] : memref<8x128xf32, #tpu.memory_space<vmem>>, vector<8x128xf32>
    tpu.vector_store %arg7[%c0_18, %c0_19], %29 {strides = array<i32>} : memref<8x128xf32, #tpu.memory_space<vmem>>, vector<8x128xf32>,
    return
  }
  func.func @transform_0(%arg0: i32) -> (i32, i32) {
    %c0_i32 = arith.constant 0 : i32
    %c0_i32_0 = arith.constant 0 : i32
    return %arg0, %c0_i32 : i32, i32
  }
  func.func @transform_1(%arg0: i32) -> (i32, i32) {
    %c0_i32 = arith.constant 0 : i32
    %c0_i32_0 = arith.constant 0 : i32
    %c0_i32_1 = arith.constant 0 : i32
    return %c0_i32, %c0_i32_0 : i32, i32
  }
  func.func @transform_2(%arg0: i32) -> (i32, i32) {
    %c0_i32 = arith.constant 0 : i32
    %c0_i32_0 = arith.constant 0 : i32
    %c0_i32_1 = arith.constant 0 : i32
    return %c0_i32, %c0_i32_0 : i32, i32
  }
  func.func @transform_3(%arg0: i32) -> (i32, i32) {
    %c0_i32 = arith.constant 0 : i32
    %c0_i32_0 = arith.constant 0 : i32
    %c0_i32_1 = arith.constant 0 : i32
    return %c0_i32, %c0_i32_0 : i32, i32
  }
  func.func @transform_4(%arg0: i32) -> (i32, i32) {
    %c0_i32 = arith.constant 0 : i32
    %c0_i32_0 = arith.constant 0 : i32
    %c0_i32_1 = arith.constant 0 : i32
    return %c0_i32, %c0_i32_0 : i32, i32
  }
  func.func @transform_5(%arg0: i32) -> (i32, i32) {
    %c0_i32 = arith.constant 0 : i32
    %c0_i32_0 = arith.constant 0 : i32
    %c0_i32_1 = arith.constant 0 : i32
    return %c0_i32, %c0_i32_0 : i32, i32
  }
  func.func @transform_6(%arg0: i32) -> (i32, i32) {
    %c0_i32 = arith.constant 0 : i32
    %c0_i32_0 = arith.constant 0 : i32
    return %arg0, %c0_i32 : i32, i32
  }
}

</mosaic_0001>

<llo_original>
// kernel: tpu_custom_call.1
$region0: #{tpu_custom_call.1}
  #allocation0 [shape = 'u32[]', space=smem, size = 0x4, offset = 0x4, fixed_abs, tag = 'smem constant byte address 0x4 - core index']
  #allocation1 [shape = 'u32[144,128]{1,0:T(1,128)}', space=vmem, size = 0x12000, scoped, tag = 'internal scratch']
  %s0 = inlined_call_operand.hbm [shape: bf16[8,512], index: 0, kind: input, shape index: {}]
  %s1 = inlined_call_operand.hbm [shape: bf16[512,1024], index: 1, kind: input, shape index: {}]
  %s2 = inlined_call_operand.hbm [shape: f32[1,1024], index: 2, kind: input, shape index: {}]
  %s3 = inlined_call_operand.hbm [shape: bf16[1024,128], index: 3, kind: input, shape index: {}]
  %s4 = inlined_call_operand.vmem [shape: f32[1,128], index: 4, kind: input, shape index: {}]
  %s5 = inlined_call_operand.hbm [shape: bf16[128,128], index: 5, kind: input, shape index: {}]
  %s6 = inlined_call_operand.hbm [shape: f32[8,128], index: 6, kind: output, shape index: {}]
  %s7 = sld [smem:[#allocation0]]
  $region54: #{tpu_custom_call.1} parent=0
    _
  %s9 = ssub.s32 1, %s7
  %s10 = scalar_select 0, %s9, %s7
  $region1: #{tpu_custom_call.1} parent=0
    #allocation2 [shape = 'u8[8192]{0}', space=vmem, size = 0x2000, scoped, tag = 'input window, operand 0, single buffered']
    #allocation3 [shape = 's32[1]{0}', space=sflag, size = 0x4, scoped, tag = 'scoped memory for tpu_custom_call.1']
    #allocation4 [shape = 's32[1]{0}', space=sflag, size = 0x4, scoped, tag = 'scoped memory for tpu_custom_call.1']
    #allocation5 [shape = 'u8[1048576]{0}', space=vmem, size = 0x100000, scoped, tag = 'input window, operand 1, single buffered']
    #allocation6 [shape = 's32[1]{0}', space=sflag, size = 0x4, scoped, tag = 'scoped memory for tpu_custom_call.1']
    #allocation7 [shape = 'u8[4096]{0}', space=vmem, size = 0x1000, scoped, tag = 'input window, operand 2, single buffered']
    #allocation8 [shape = 'u8[262144]{0}', space=vmem, size = 0x40000, scoped, tag = 'input window, operand 3, single buffered']
    #allocation9 [shape = 's32[1]{0}', space=sflag, size = 0x4, scoped, tag = 'scoped memory for tpu_custom_call.1']
    #allocation10 [shape = 'u8[32768]{0}', space=vmem, size = 0x8000, scoped, tag = 'input window, operand 5, single buffered']
    #allocation11 [shape = 'u8[4096]{0}', space=vmem, size = 0x1000, scoped, tag = 'output window, operand 0, single buffered']
    %11 = vsyncpa [#allocation3], 0
    %12 = vsyncpa [#allocation6], 0
    %13 = vsyncpa [#allocation9], 0
    %14 = vsyncpa [#allocation4], 0
    // Predicated region
    $region2: #{tpu_custom_call.1} parent=1 // pred_check
      _
    $region3: #{tpu_custom_call.1} parent=1 // pred_check_branch
      %16 = sbr.rel (0) target = $region5
    $region4: #{tpu_custom_call.1} parent=1 // pred_region
      %s18 = ssub.s32 256, 256
      %19 = vsyncadd [#allocation3], %s18
      %s21 = sshll.u32 [#allocation2], 4
      %s22 = int_to_ptr.vmem [resolvable:$true] %s21
      %24 = dma.hbm_to_vmem [thread:$0]  %s0, 256, %s22, [#allocation3]
    $region5: #{tpu_custom_call.1} parent=1 // pred_fallthru
      _
    // Predicated region
    $region6: #{tpu_custom_call.1} parent=1 // pred_check
      _
    $region7: #{tpu_custom_call.1} parent=1 // pred_check_branch
      %26 = sbr.rel (0) target = $region9
    $region8: #{tpu_custom_call.1} parent=1 // pred_region
      %s28 = ssub.s32 32768, 32768
      %29 = vsyncadd [#allocation6], %s28
      %s30 = sshll.u32 [#allocation5], 4
      %s31 = int_to_ptr.vmem [resolvable:$true] %s30
      %36 = dma.hbm_to_vmem [thread:$0]  %s1, 32768, %s31, [#allocation6], 512, 512, 32
    $region9: #{tpu_custom_call.1} parent=1 // pred_fallthru
      _
    // Predicated region
    $region10: #{tpu_custom_call.1} parent=1 // pred_check
      _
    $region11: #{tpu_custom_call.1} parent=1 // pred_check_branch
      %38 = sbr.rel (0) target = $region13
    $region12: #{tpu_custom_call.1} parent=1 // pred_region
      %s40 = ssub.s32 128, 128
      %41 = vsyncadd [#allocation6], %s40
      %s43 = sshll.u32 [#allocation7], 4
      %s44 = int_to_ptr.vmem [resolvable:$true] %s43
      %46 = dma.hbm_to_vmem [thread:$0]  %s2, 128, %s44, [#allocation6]
    $region13: #{tpu_custom_call.1} parent=1 // pred_fallthru
      _
    // Predicated region
    $region14: #{tpu_custom_call.1} parent=1 // pred_check
      _
    $region15: #{tpu_custom_call.1} parent=1 // pred_check_branch
      %48 = sbr.rel (0) target = $region17
    $region16: #{tpu_custom_call.1} parent=1 // pred_region
      %s50 = ssub.s32 8192, 8192
      %51 = vsyncadd [#allocation9], %s50
      %s52 = sshll.u32 [#allocation8], 4
      %s53 = int_to_ptr.vmem [resolvable:$true] %s52
      %58 = dma.hbm_to_vmem [thread:$0]  %s3, 8192, %s53, [#allocation9], 64, 64, 4
    $region17: #{tpu_custom_call.1} parent=1 // pred_fallthru
      _
    // Predicated region
    $region18: #{tpu_custom_call.1} parent=1 // pred_check
      _
    $region19: #{tpu_custom_call.1} parent=1 // pred_check_branch
      %60 = sbr.rel (0) target = $region21
    $region20: #{tpu_custom_call.1} parent=1 // pred_region
      _
    $region21: #{tpu_custom_call.1} parent=1 // pred_fallthru
      _
    // Predicated region
    $region22: #{tpu_custom_call.1} parent=1 // pred_check
      _
    $region23: #{tpu_custom_call.1} parent=1 // pred_check_branch
      %62 = sbr.rel (0) target = $region25
    $region24: #{tpu_custom_call.1} parent=1 // pred_region
      %s64 = ssub.s32 1024, 1024
      %65 = vsyncadd [#allocation9], %s64
      %s66 = sshll.u32 [#allocation10], 4
      %s67 = int_to_ptr.vmem [resolvable:$true] %s66
      %72 = dma.hbm_to_vmem [thread:$0]  %s5, 1024, %s67, [#allocation9], 64, 64, 4
    $region25: #{tpu_custom_call.1} parent=1 // pred_fallthru
      _
    // Predicated region
    $region26: #{tpu_custom_call.1} parent=1 // pred_check
      _
    $region27: #{tpu_custom_call.1} parent=1 // pred_check_branch
      %74 = sbr.rel (0) target = $region29
    $region28: #{tpu_custom_call.1} parent=1 // pred_region
      %75 = dma.done [#allocation3], 256
    $region29: #{tpu_custom_call.1} parent=1 // pred_fallthru
      _
    // Predicated region
    $region30: #{tpu_custom_call.1} parent=1 // pred_check
      _
    $region31: #{tpu_custom_call.1} parent=1 // pred_check_branch
      %77 = sbr.rel (0) target = $region33
    $region32: #{tpu_custom_call.1} parent=1 // pred_region
      %78 = dma.done [#allocation6], 32768
    $region33: #{tpu_custom_call.1} parent=1 // pred_fallthru
      _
    // Predicated region
    $region34: #{tpu_custom_call.1} parent=1 // pred_check
      _
    $region35: #{tpu_custom_call.1} parent=1 // pred_check_branch
      %80 = sbr.rel (0) target = $region37
    $region36: #{tpu_custom_call.1} parent=1 // pred_region
      %81 = dma.done [#allocation6], 128
    $region37: #{tpu_custom_call.1} parent=1 // pred_fallthru
      _
    // Predicated region
    $region38: #{tpu_custom_call.1} parent=1 // pred_check
      _
    $region39: #{tpu_custom_call.1} parent=1 // pred_check_branch
      %83 = sbr.rel (0) target = $region41
    $region40: #{tpu_custom_call.1} parent=1 // pred_region
      %84 = dma.done [#allocation9], 8192
    $region41: #{tpu_custom_call.1} parent=1 // pred_fallthru
      _
    // Predicated region
    $region42: #{tpu_custom_call.1} parent=1 // pred_check
      _
    $region43: #{tpu_custom_call.1} parent=1 // pred_check_branch
      %86 = sbr.rel (0) target = $region45
    $region44: #{tpu_custom_call.1} parent=1 // pred_region
      %87 = dma.done [#allocation9], 1024
    $region45: #{tpu_custom_call.1} parent=1 // pred_fallthru
      _
    %v89 = vld [vmem:[#allocation2] sm:$0xff]
    %v90 = vld [vmem:[#allocation2 + $0x8] sm:$0xff]
    %v91 = vld [vmem:[#allocation5] sm:$0xff]
    %v92 = vld [vmem:[#allocation5 + $0x8] sm:$0xff]
    %v93 = vld [vmem:[#allocation5 + $0x10] sm:$0xff]
    %v94 = vld [vmem:[#allocation5 + $0x18] sm:$0xff]
    %v95 = vld [vmem:[#allocation5 + $0x20] sm:$0xff]
    %v96 = vld [vmem:[#allocation5 + $0x28] sm:$0xff]
    %v97 = vld [vmem:[#allocation5 + $0x30] sm:$0xff]
    %v98 = vld [vmem:[#allocation5 + $0x38] sm:$0xff]
    %v99 = vld [vmem:[#allocation5 + $0x40] sm:$0xff]
    %v100 = vld [vmem:[#allocation5 + $0x48] sm:$0xff]
    %v101 = vld [vmem:[#allocation5 + $0x50] sm:$0xff]
    %v102 = vld [vmem:[#allocation5 + $0x58] sm:$0xff]
    %v103 = vld [vmem:[#allocation5 + $0x60] sm:$0xff]
    %v104 = vld [vmem:[#allocation5 + $0x68] sm:$0xff]
    %v105 = vld [vmem:[#allocation5 + $0x70] sm:$0xff]
    %v106 = vld [vmem:[#allocation5 + $0x78] sm:$0xff]
    %v107 = vld [vmem:[#allocation5 + $0x80] sm:$0xff]
    %v108 = vld [vmem:[#allocation5 + $0x88] sm:$0xff]
    %v109 = vld [vmem:[#allocation5 + $0x90] sm:$0xff]
    %v110 = vld [vmem:[#allocation5 + $0x98] sm:$0xff]
    %v111 = vld [vmem:[#allocation5 + $0xa0] sm:$0xff]
    %v112 = vld [vmem:[#allocation5 + $0xa8] sm:$0xff]
    %v113 = vld [vmem:[#allocation5 + $0xb0] sm:$0xff]
    %v114 = vld [vmem:[#allocation5 + $0xb8] sm:$0xff]
    %v115 = vld [vmem:[#allocation5 + $0xc0] sm:$0xff]
    %v116 = vld [vmem:[#allocation5 + $0xc8] sm:$0xff]
    %v117 = vld [vmem:[#allocation5 + $0xd0] sm:$0xff]
    %v118 = vld [vmem:[#allocation5 + $0xd8] sm:$0xff]
    %v119 = vld [vmem:[#allocation5 + $0xe0] sm:$0xff]
    %v120 = vld [vmem:[#allocation5 + $0xe8] sm:$0xff]
    %v121 = vld [vmem:[#allocation5 + $0xf0] sm:$0xff]
    %v122 = vld [vmem:[#allocation5 + $0xf8] sm:$0xff]
    %v123 = vld [vmem:[#allocation5 + $0x100] sm:$0xff]
    %v124 = vld [vmem:[#allocation5 + $0x108] sm:$0xff]
    %v125 = vld [vmem:[#allocation5 + $0x110] sm:$0xff]
    %v126 = vld [vmem:[#allocation5 + $0x118] sm:$0xff]
    %v127 = vld [vmem:[#allocation5 + $0x120] sm:$0xff]
    %v128 = vld [vmem:[#allocation5 + $0x128] sm:$0xff]
    %v129 = vld [vmem:[#allocation5 + $0x130] sm:$0xff]
    %v130 = vld [vmem:[#allocation5 + $0x138] sm:$0xff]
    %v131 = vld [vmem:[#allocation5 + $0x140] sm:$0xff]
    %v132 = vld [vmem:[#allocation5 + $0x148] sm:$0xff]
    %v133 = vld [vmem:[#allocation5 + $0x150] sm:$0xff]
    %v134 = vld [vmem:[#allocation5 + $0x158] sm:$0xff]
    %v135 = vld [vmem:[#allocation5 + $0x160] sm:$0xff]
    %v136 = vld [vmem:[#allocation5 + $0x168] sm:$0xff]
    %v137 = vld [vmem:[#allocation5 + $0x170] sm:$0xff]
    %v138 = vld [vmem:[#allocation5 + $0x178] sm:$0xff]
    %v139 = vld [vmem:[#allocation5 + $0x180] sm:$0xff]
    %v140 = vld [vmem:[#allocation5 + $0x188] sm:$0xff]
    %v141 = vld [vmem:[#allocation5 + $0x190] sm:$0xff]
    %v142 = vld [vmem:[#allocation5 + $0x198] sm:$0xff]
    %v143 = vld [vmem:[#allocation5 + $0x1a0] sm:$0xff]
    %v144 = vld [vmem:[#allocation5 + $0x1a8] sm:$0xff]
    %v145 = vld [vmem:[#allocation5 + $0x1b0] sm:$0xff]
    %v146 = vld [vmem:[#allocation5 + $0x1b8] sm:$0xff]
    %v147 = vld [vmem:[#allocation5 + $0x1c0] sm:$0xff]
    %v148 = vld [vmem:[#allocation5 + $0x1c8] sm:$0xff]
    %v149 = vld [vmem:[#allocation5 + $0x1d0] sm:$0xff]
    %v150 = vld [vmem:[#allocation5 + $0x1d8] sm:$0xff]
    %v151 = vld [vmem:[#allocation5 + $0x1e0] sm:$0xff]
    %v152 = vld [vmem:[#allocation5 + $0x1e8] sm:$0xff]
    %v153 = vld [vmem:[#allocation5 + $0x1f0] sm:$0xff]
    %v154 = vld [vmem:[#allocation5 + $0x1f8] sm:$0xff]
    %v155 = vld [vmem:[#allocation5 + $0x200] sm:$0xff]
    %v156 = vld [vmem:[#allocation5 + $0x208] sm:$0xff]
    %v157 = vld [vmem:[#allocation5 + $0x210] sm:$0xff]
    %v158 = vld [vmem:[#allocation5 + $0x218] sm:$0xff]
    %v159 = vld [vmem:[#allocation5 + $0x220] sm:$0xff]
    %v160 = vld [vmem:[#allocation5 + $0x228] sm:$0xff]
    %v161 = vld [vmem:[#allocation5 + $0x230] sm:$0xff]
    %v162 = vld [vmem:[#allocation5 + $0x238] sm:$0xff]
    %v163 = vld [vmem:[#allocation5 + $0x240] sm:$0xff]
    %v164 = vld [vmem:[#allocation5 + $0x248] sm:$0xff]
    %v165 = vld [vmem:[#allocation5 + $0x250] sm:$0xff]
    %v166 = vld [vmem:[#allocation5 + $0x258] sm:$0xff]
    %v167 = vld [vmem:[#allocation5 + $0x260] sm:$0xff]
    %v168 = vld [vmem:[#allocation5 + $0x268] sm:$0xff]
    %v169 = vld [vmem:[#allocation5 + $0x270] sm:$0xff]
    %v170 = vld [vmem:[#allocation5 + $0x278] sm:$0xff]
    %v171 = vld [vmem:[#allocation5 + $0x280] sm:$0xff]
    %v172 = vld [vmem:[#allocation5 + $0x288] sm:$0xff]
    %v173 = vld [vmem:[#allocation5 + $0x290] sm:$0xff]
    %v174 = vld [vmem:[#allocation5 + $0x298] sm:$0xff]
    %v175 = vld [vmem:[#allocation5 + $0x2a0] sm:$0xff]
    %v176 = vld [vmem:[#allocation5 + $0x2a8] sm:$0xff]
    %v177 = vld [vmem:[#allocation5 + $0x2b0] sm:$0xff]
    %v178 = vld [vmem:[#allocation5 + $0x2b8] sm:$0xff]
    %v179 = vld [vmem:[#allocation5 + $0x2c0] sm:$0xff]
    %v180 = vld [vmem:[#allocation5 + $0x2c8] sm:$0xff]
    %v181 = vld [vmem:[#allocation5 + $0x2d0] sm:$0xff]
    %v182 = vld [vmem:[#allocation5 + $0x2d8] sm:$0xff]
    %v183 = vld [vmem:[#allocation5 + $0x2e0] sm:$0xff]
    %v184 = vld [vmem:[#allocation5 + $0x2e8] sm:$0xff]
    %v185 = vld [vmem:[#allocation5 + $0x2f0] sm:$0xff]
    %v186 = vld [vmem:[#allocation5 + $0x2f8] sm:$0xff]
    %v187 = vld [vmem:[#allocation5 + $0x300] sm:$0xff]
    %v188 = vld [vmem:[#allocation5 + $0x308] sm:$0xff]
    %v189 = vld [vmem:[#allocation5 + $0x310] sm:$0xff]
    %v190 = vld [vmem:[#allocation5 + $0x318] sm:$0xff]
    %v191 = vld [vmem:[#allocation5 + $0x320] sm:$0xff]
    %v192 = vld [vmem:[#allocation5 + $0x328] sm:$0xff]
    %v193 = vld [vmem:[#allocation5 + $0x330] sm:$0xff]
    %v194 = vld [vmem:[#allocation5 + $0x338] sm:$0xff]
    %v195 = vld [vmem:[#allocation5 + $0x340] sm:$0xff]
    %v196 = vld [vmem:[#allocation5 + $0x348] sm:$0xff]
    %v197 = vld [vmem:[#allocation5 + $0x350] sm:$0xff]
    %v198 = vld [vmem:[#allocation5 + $0x358] sm:$0xff]
    %v199 = vld [vmem:[#allocation5 + $0x360] sm:$0xff]
    %v200 = vld [vmem:[#allocation5 + $0x368] sm:$0xff]
    %v201 = vld [vmem:[#allocation5 + $0x370] sm:$0xff]
    %v202 = vld [vmem:[#allocation5 + $0x378] sm:$0xff]
    %v203 = vld [vmem:[#allocation5 + $0x380] sm:$0xff]
    %v204 = vld [vmem:[#allocation5 + $0x388] sm:$0xff]
    %v205 = vld [vmem:[#allocation5 + $0x390] sm:$0xff]
    %v206 = vld [vmem:[#allocation5 + $0x398] sm:$0xff]
    %v207 = vld [vmem:[#allocation5 + $0x3a0] sm:$0xff]
    %v208 = vld [vmem:[#allocation5 + $0x3a8] sm:$0xff]
    %v209 = vld [vmem:[#allocation5 + $0x3b0] sm:$0xff]
    %v210 = vld [vmem:[#allocation5 + $0x3b8] sm:$0xff]
    %v211 = vld [vmem:[#allocation5 + $0x3c0] sm:$0xff]
    %v212 = vld [vmem:[#allocation5 + $0x3c8] sm:$0xff]
    %v213 = vld [vmem:[#allocation5 + $0x3d0] sm:$0xff]
    %v214 = vld [vmem:[#allocation5 + $0x3d8] sm:$0xff]
    %v215 = vld [vmem:[#allocation5 + $0x3e0] sm:$0xff]
    %v216 = vld [vmem:[#allocation5 + $0x3e8] sm:$0xff]
    %v217 = vld [vmem:[#allocation5 + $0x3f0] sm:$0xff]
    %v218 = vld [vmem:[#allocation5 + $0x3f8] sm:$0xff]
    %v219 = vld [vmem:[#allocation5 + $0x400] sm:$0xff]
    %v220 = vld [vmem:[#allocation5 + $0x408] sm:$0xff]
    %v221 = vld [vmem:[#allocation5 + $0x410] sm:$0xff]
    %v222 = vld [vmem:[#allocation5 + $0x418] sm:$0xff]
    %v223 = vld [vmem:[#allocation5 + $0x420] sm:$0xff]
    %v224 = vld [vmem:[#allocation5 + $0x428] sm:$0xff]
    %v225 = vld [vmem:[#allocation5 + $0x430] sm:$0xff]
    %v226 = vld [vmem:[#allocation5 + $0x438] sm:$0xff]
    %v227 = vld [vmem:[#allocation5 + $0x440] sm:$0xff]
    %v228 = vld [vmem:[#allocation5 + $0x448] sm:$0xff]
    %v229 = vld [vmem:[#allocation5 + $0x450] sm:$0xff]
    %v230 = vld [vmem:[#allocation5 + $0x458] sm:$0xff]
    %v231 = vld [vmem:[#allocation5 + $0x460] sm:$0xff]
    %v232 = vld [vmem:[#allocation5 + $0x468] sm:$0xff]
    %v233 = vld [vmem:[#allocation5 + $0x470] sm:$0xff]
    %v234 = vld [vmem:[#allocation5 + $0x478] sm:$0xff]
    %v235 = vld [vmem:[#allocation5 + $0x480] sm:$0xff]
    %v236 = vld [vmem:[#allocation5 + $0x488] sm:$0xff]
    %v237 = vld [vmem:[#allocation5 + $0x490] sm:$0xff]
    %v238 = vld [vmem:[#allocation5 + $0x498] sm:$0xff]
    %v239 = vld [vmem:[#allocation5 + $0x4a0] sm:$0xff]
    %v240 = vld [vmem:[#allocation5 + $0x4a8] sm:$0xff]
    %v241 = vld [vmem:[#allocation5 + $0x4b0] sm:$0xff]
    %v242 = vld [vmem:[#allocation5 + $0x4b8] sm:$0xff]
    %v243 = vld [vmem:[#allocation5 + $0x4c0] sm:$0xff]
    %v244 = vld [vmem:[#allocation5 + $0x4c8] sm:$0xff]
    %v245 = vld [vmem:[#allocation5 + $0x4d0] sm:$0xff]
    %v246 = vld [vmem:[#allocation5 + $0x4d8] sm:$0xff]
    %v247 = vld [vmem:[#allocation5 + $0x4e0] sm:$0xff]
    %v248 = vld [vmem:[#allocation5 + $0x4e8] sm:$0xff]
    %v249 = vld [vmem:[#allocation5 + $0x4f0] sm:$0xff]
    %v250 = vld [vmem:[#allocation5 + $0x4f8] sm:$0xff]
    %v251 = vld [vmem:[#allocation5 + $0x500] sm:$0xff]
    %v252 = vld [vmem:[#allocation5 + $0x508] sm:$0xff]
    %v253 = vld [vmem:[#allocation5 + $0x510] sm:$0xff]
    %v254 = vld [vmem:[#allocation5 + $0x518] sm:$0xff]
    %v255 = vld [vmem:[#allocation5 + $0x520] sm:$0xff]
    %v256 = vld [vmem:[#allocation5 + $0x528] sm:$0xff]
    %v257 = vld [vmem:[#allocation5 + $0x530] sm:$0xff]
    %v258 = vld [vmem:[#allocation5 + $0x538] sm:$0xff]
    %v259 = vld [vmem:[#allocation5 + $0x540] sm:$0xff]
    %v260 = vld [vmem:[#allocation5 + $0x548] sm:$0xff]
    %v261 = vld [vmem:[#allocation5 + $0x550] sm:$0xff]
    %v262 = vld [vmem:[#allocation5 + $0x558] sm:$0xff]
    %v263 = vld [vmem:[#allocation5 + $0x560] sm:$0xff]
    %v264 = vld [vmem:[#allocation5 + $0x568] sm:$0xff]
    %v265 = vld [vmem:[#allocation5 + $0x570] sm:$0xff]
    %v266 = vld [vmem:[#allocation5 + $0x578] sm:$0xff]
    %v267 = vld [vmem:[#allocation5 + $0x580] sm:$0xff]
    %v268 = vld [vmem:[#allocation5 + $0x588] sm:$0xff]
    %v269 = vld [vmem:[#allocation5 + $0x590] sm:$0xff]
    %v270 = vld [vmem:[#allocation5 + $0x598] sm:$0xff]
    %v271 = vld [vmem:[#allocation5 + $0x5a0] sm:$0xff]
    %v272 = vld [vmem:[#allocation5 + $0x5a8] sm:$0xff]
    %v273 = vld [vmem:[#allocation5 + $0x5b0] sm:$0xff]
    %v274 = vld [vmem:[#allocation5 + $0x5b8] sm:$0xff]
    %v275 = vld [vmem:[#allocation5 + $0x5c0] sm:$0xff]
    %v276 = vld [vmem:[#allocation5 + $0x5c8] sm:$0xff]
    %v277 = vld [vmem:[#allocation5 + $0x5d0] sm:$0xff]
    %v278 = vld [vmem:[#allocation5 + $0x5d8] sm:$0xff]
    %v279 = vld [vmem:[#allocation5 + $0x5e0] sm:$0xff]
    %v280 = vld [vmem:[#allocation5 + $0x5e8] sm:$0xff]
    %v281 = vld [vmem:[#allocation5 + $0x5f0] sm:$0xff]
    %v282 = vld [vmem:[#allocation5 + $0x5f8] sm:$0xff]
    %v283 = vld [vmem:[#allocation5 + $0x600] sm:$0xff]
    %v284 = vld [vmem:[#allocation5 + $0x608] sm:$0xff]
    %v285 = vld [vmem:[#allocation5 + $0x610] sm:$0xff]
    %v286 = vld [vmem:[#allocation5 + $0x618] sm:$0xff]
    %v287 = vld [vmem:[#allocation5 + $0x620] sm:$0xff]
    %v288 = vld [vmem:[#allocation5 + $0x628] sm:$0xff]
    %v289 = vld [vmem:[#allocation5 + $0x630] sm:$0xff]
    %v290 = vld [vmem:[#allocation5 + $0x638] sm:$0xff]
    %v291 = vld [vmem:[#allocation5 + $0x640] sm:$0xff]
    %v292 = vld [vmem:[#allocation5 + $0x648] sm:$0xff]
    %v293 = vld [vmem:[#allocation5 + $0x650] sm:$0xff]
    %v294 = vld [vmem:[#allocation5 + $0x658] sm:$0xff]
    %v295 = vld [vmem:[#allocation5 + $0x660] sm:$0xff]
    %v296 = vld [vmem:[#allocation5 + $0x668] sm:$0xff]
    %v297 = vld [vmem:[#allocation5 + $0x670] sm:$0xff]
    %v298 = vld [vmem:[#allocation5 + $0x678] sm:$0xff]
    %v299 = vld [vmem:[#allocation5 + $0x680] sm:$0xff]
    %v300 = vld [vmem:[#allocation5 + $0x688] sm:$0xff]
    %v301 = vld [vmem:[#allocation5 + $0x690] sm:$0xff]
    %v302 = vld [vmem:[#allocation5 + $0x698] sm:$0xff]
    %v303 = vld [vmem:[#allocation5 + $0x6a0] sm:$0xff]
    %v304 = vld [vmem:[#allocation5 + $0x6a8] sm:$0xff]
    %v305 = vld [vmem:[#allocation5 + $0x6b0] sm:$0xff]
    %v306 = vld [vmem:[#allocation5 + $0x6b8] sm:$0xff]
    %v307 = vld [vmem:[#allocation5 + $0x6c0] sm:$0xff]
    %v308 = vld [vmem:[#allocation5 + $0x6c8] sm:$0xff]
    %v309 = vld [vmem:[#allocation5 + $0x6d0] sm:$0xff]
    %v310 = vld [vmem:[#allocation5 + $0x6d8] sm:$0xff]
    %v311 = vld [vmem:[#allocation5 + $0x6e0] sm:$0xff]
    %v312 = vld [vmem:[#allocation5 + $0x6e8] sm:$0xff]
    %v313 = vld [vmem:[#allocation5 + $0x6f0] sm:$0xff]
    %v314 = vld [vmem:[#allocation5 + $0x6f8] sm:$0xff]
    %v315 = vld [vmem:[#allocation5 + $0x700] sm:$0xff]
    %v316 = vld [vmem:[#allocation5 + $0x708] sm:$0xff]
    %v317 = vld [vmem:[#allocation5 + $0x710] sm:$0xff]
    %v318 = vld [vmem:[#allocation5 + $0x718] sm:$0xff]
    %v319 = vld [vmem:[#allocation5 + $0x720] sm:$0xff]
    %v320 = vld [vmem:[#allocation5 + $0x728] sm:$0xff]
    %v321 = vld [vmem:[#allocation5 + $0x730] sm:$0xff]
    %v322 = vld [vmem:[#allocation5 + $0x738] sm:$0xff]
    %v323 = vld [vmem:[#allocation5 + $0x740] sm:$0xff]
    %v324 = vld [vmem:[#allocation5 + $0x748] sm:$0xff]
    %v325 = vld [vmem:[#allocation5 + $0x750] sm:$0xff]
    %v326 = vld [vmem:[#allocation5 + $0x758] sm:$0xff]
    %v327 = vld [vmem:[#allocation5 + $0x760] sm:$0xff]
    %v328 = vld [vmem:[#allocation5 + $0x768] sm:$0xff]
    %v329 = vld [vmem:[#allocation5 + $0x770] sm:$0xff]
    %v330 = vld [vmem:[#allocation5 + $0x778] sm:$0xff]
    %v331 = vld [vmem:[#allocation5 + $0x780] sm:$0xff]
    %v332 = vld [vmem:[#allocation5 + $0x788] sm:$0xff]
    %v333 = vld [vmem:[#allocation5 + $0x790] sm:$0xff]
    %v334 = vld [vmem:[#allocation5 + $0x798] sm:$0xff]
    %v335 = vld [vmem:[#allocation5 + $0x7a0] sm:$0xff]
    %v336 = vld [vmem:[#allocation5 + $0x7a8] sm:$0xff]
    %v337 = vld [vmem:[#allocation5 + $0x7b0] sm:$0xff]
    %v338 = vld [vmem:[#allocation5 + $0x7b8] sm:$0xff]
    %v339 = vld [vmem:[#allocation5 + $0x7c0] sm:$0xff]
    %v340 = vld [vmem:[#allocation5 + $0x7c8] sm:$0xff]
    %v341 = vld [vmem:[#allocation5 + $0x7d0] sm:$0xff]
    %v342 = vld [vmem:[#allocation5 + $0x7d8] sm:$0xff]
    %v343 = vld [vmem:[#allocation5 + $0x7e0] sm:$0xff]
    %v344 = vld [vmem:[#allocation5 + $0x7e8] sm:$0xff]
    %v345 = vld [vmem:[#allocation5 + $0x7f0] sm:$0xff]
    %v346 = vld [vmem:[#allocation5 + $0x7f8] sm:$0xff]
    %v347 = vld [vmem:[#allocation7] sm:$0xff]
    %v349 = vlaneseq
    %v350 = vshrl.u32 %v349, 7
    %v351 = vsub.s32 0, %v350
    %v352 = vrot.slane %v347, %v351
    %v353 = vlaneseq
    %v354 = vshrl.u32 %v353, 7
    %v355 = vsub.s32 1, %v354
    %v356 = vrot.slane %v347, %v355
    %v357 = vlaneseq
    %v358 = vshrl.u32 %v357, 7
    %v359 = vsub.s32 2, %v358
    %v360 = vrot.slane %v347, %v359
    %v361 = vlaneseq
    %v362 = vshrl.u32 %v361, 7
    %v363 = vsub.s32 3, %v362
    %v364 = vrot.slane %v347, %v363
    %v365 = vlaneseq
    %v366 = vshrl.u32 %v365, 7
    %v367 = vsub.s32 4, %v366
    %v368 = vrot.slane %v347, %v367
    %v369 = vlaneseq
    %v370 = vshrl.u32 %v369, 7
    %v371 = vsub.s32 5, %v370
    %v372 = vrot.slane %v347, %v371
    %v373 = vlaneseq
    %v374 = vshrl.u32 %v373, 7
    %v375 = vsub.s32 6, %v374
    %v376 = vrot.slane %v347, %v375
    %v377 = vlaneseq
    %v378 = vshrl.u32 %v377, 7
    %v379 = vsub.s32 7, %v378
    %v380 = vrot.slane %v347, %v379
    %v391 = vunpack.c.l.b16 %v89
    %v392 = vunpack.c.h.b16 %v89
    %v393 = vunpack.c.l.b16 %v90
    %v394 = vunpack.c.h.b16 %v90
    %v395 = vpack.c.b16 %v391, %v391
    %v396 = vpack.c.b16 %v392, %v392
    %v397 = vpack.c.b16 %v393, %v393
    %v398 = vpack.c.b16 %v394, %v394
    %v659 = vunpack.c.l.b16 %v91
    %v660 = vunpack.c.h.b16 %v91
    %v661 = vunpack.c.l.b16 %v92
    %v662 = vunpack.c.h.b16 %v92
    %v663 = vunpack.c.l.b16 %v93
    %v664 = vunpack.c.h.b16 %v93
    %v665 = vunpack.c.l.b16 %v94
    %v666 = vunpack.c.h.b16 %v94
    %v667 = vunpack.c.l.b16 %v95
    %v668 = vunpack.c.h.b16 %v95
    %v669 = vunpack.c.l.b16 %v96
    %v670 = vunpack.c.h.b16 %v96
    %v671 = vunpack.c.l.b16 %v97
    %v672 = vunpack.c.h.b16 %v97
    %v673 = vunpack.c.l.b16 %v98
    %v674 = vunpack.c.h.b16 %v98
    %v675 = vunpack.c.l.b16 %v99
    %v676 = vunpack.c.h.b16 %v99
    %v677 = vunpack.c.l.b16 %v100
    %v678 = vunpack.c.h.b16 %v100
    %v679 = vunpack.c.l.b16 %v101
    %v680 = vunpack.c.h.b16 %v101
    %v681 = vunpack.c.l.b16 %v102
    %v682 = vunpack.c.h.b16 %v102
    %v683 = vunpack.c.l.b16 %v103
    %v684 = vunpack.c.h.b16 %v103
    %v685 = vunpack.c.l.b16 %v104
    %v686 = vunpack.c.h.b16 %v104
    %v687 = vunpack.c.l.b16 %v105
    %v688 = vunpack.c.h.b16 %v105
    %v689 = vunpack.c.l.b16 %v106
    %v690 = vunpack.c.h.b16 %v106
    %v691 = vunpack.c.l.b16 %v107
    %v692 = vunpack.c.h.b16 %v107
    %v693 = vunpack.c.l.b16 %v108
    %v694 = vunpack.c.h.b16 %v108
    %v695 = vunpack.c.l.b16 %v109
    %v696 = vunpack.c.h.b16 %v109
    %v697 = vunpack.c.l.b16 %v110
    %v698 = vunpack.c.h.b16 %v110
    %v699 = vunpack.c.l.b16 %v111
    %v700 = vunpack.c.h.b16 %v111
    %v701 = vunpack.c.l.b16 %v112
    %v702 = vunpack.c.h.b16 %v112
    %v703 = vunpack.c.l.b16 %v113
    %v704 = vunpack.c.h.b16 %v113
    %v705 = vunpack.c.l.b16 %v114
    %v706 = vunpack.c.h.b16 %v114
    %v707 = vunpack.c.l.b16 %v115
    %v708 = vunpack.c.h.b16 %v115
    %v709 = vunpack.c.l.b16 %v116
    %v710 = vunpack.c.h.b16 %v116
    %v711 = vunpack.c.l.b16 %v117
    %v712 = vunpack.c.h.b16 %v117
    %v713 = vunpack.c.l.b16 %v118
    %v714 = vunpack.c.h.b16 %v118
    %v715 = vunpack.c.l.b16 %v119
    %v716 = vunpack.c.h.b16 %v119
    %v717 = vunpack.c.l.b16 %v120
    %v718 = vunpack.c.h.b16 %v120
    %v719 = vunpack.c.l.b16 %v121
    %v720 = vunpack.c.h.b16 %v121
    %v721 = vunpack.c.l.b16 %v122
    %v722 = vunpack.c.h.b16 %v122
    %v723 = vunpack.c.l.b16 %v123
    %v724 = vunpack.c.h.b16 %v123
    %v725 = vunpack.c.l.b16 %v124
    %v726 = vunpack.c.h.b16 %v124
    %v727 = vunpack.c.l.b16 %v125
    %v728 = vunpack.c.h.b16 %v125
    %v729 = vunpack.c.l.b16 %v126
    %v730 = vunpack.c.h.b16 %v126
    %v731 = vunpack.c.l.b16 %v127
    %v732 = vunpack.c.h.b16 %v127
    %v733 = vunpack.c.l.b16 %v128
    %v734 = vunpack.c.h.b16 %v128
    %v735 = vunpack.c.l.b16 %v129
    %v736 = vunpack.c.h.b16 %v129
    %v737 = vunpack.c.l.b16 %v130
    %v738 = vunpack.c.h.b16 %v130
    %v739 = vunpack.c.l.b16 %v131
    %v740 = vunpack.c.h.b16 %v131
    %v741 = vunpack.c.l.b16 %v132
    %v742 = vunpack.c.h.b16 %v132
    %v743 = vunpack.c.l.b16 %v133
    %v744 = vunpack.c.h.b16 %v133
    %v745 = vunpack.c.l.b16 %v134
    %v746 = vunpack.c.h.b16 %v134
    %v747 = vunpack.c.l.b16 %v135
    %v748 = vunpack.c.h.b16 %v135
    %v749 = vunpack.c.l.b16 %v136
    %v750 = vunpack.c.h.b16 %v136
    %v751 = vunpack.c.l.b16 %v137
    %v752 = vunpack.c.h.b16 %v137
    %v753 = vunpack.c.l.b16 %v138
    %v754 = vunpack.c.h.b16 %v138
    %v755 = vunpack.c.l.b16 %v139
    %v756 = vunpack.c.h.b16 %v139
    %v757 = vunpack.c.l.b16 %v140
    %v758 = vunpack.c.h.b16 %v140
    %v759 = vunpack.c.l.b16 %v141
    %v760 = vunpack.c.h.b16 %v141
    %v761 = vunpack.c.l.b16 %v142
    %v762 = vunpack.c.h.b16 %v142
    %v763 = vunpack.c.l.b16 %v143
    %v764 = vunpack.c.h.b16 %v143
    %v765 = vunpack.c.l.b16 %v144
    %v766 = vunpack.c.h.b16 %v144
    %v767 = vunpack.c.l.b16 %v145
    %v768 = vunpack.c.h.b16 %v145
    %v769 = vunpack.c.l.b16 %v146
    %v770 = vunpack.c.h.b16 %v146
    %v771 = vunpack.c.l.b16 %v147
    %v772 = vunpack.c.h.b16 %v147
    %v773 = vunpack.c.l.b16 %v148
    %v774 = vunpack.c.h.b16 %v148
    %v775 = vunpack.c.l.b16 %v149
    %v776 = vunpack.c.h.b16 %v149
    %v777 = vunpack.c.l.b16 %v150
    %v778 = vunpack.c.h.b16 %v150
    %v779 = vunpack.c.l.b16 %v151
    %v780 = vunpack.c.h.b16 %v151
    %v781 = vunpack.c.l.b16 %v152
    %v782 = vunpack.c.h.b16 %v152
    %v783 = vunpack.c.l.b16 %v153
    %v784 = vunpack.c.h.b16 %v153
    %v785 = vunpack.c.l.b16 %v154
    %v786 = vunpack.c.h.b16 %v154
    %v787 = vunpack.c.l.b16 %v155
    %v788 = vunpack.c.h.b16 %v155
    %v789 = vunpack.c.l.b16 %v156
    %v790 = vunpack.c.h.b16 %v156
    %v791 = vunpack.c.l.b16 %v157
    %v792 = vunpack.c.h.b16 %v157
    %v793 = vunpack.c.l.b16 %v158
    %v794 = vunpack.c.h.b16 %v158
    %v795 = vunpack.c.l.b16 %v159
    %v796 = vunpack.c.h.b16 %v159
    %v797 = vunpack.c.l.b16 %v160
    %v798 = vunpack.c.h.b16 %v160
    %v799 = vunpack.c.l.b16 %v161
    %v800 = vunpack.c.h.b16 %v161
    %v801 = vunpack.c.l.b16 %v162
    %v802 = vunpack.c.h.b16 %v162
    %v803 = vunpack.c.l.b16 %v163
    %v804 = vunpack.c.h.b16 %v163
    %v805 = vunpack.c.l.b16 %v164
    %v806 = vunpack.c.h.b16 %v164
    %v807 = vunpack.c.l.b16 %v165
    %v808 = vunpack.c.h.b16 %v165
    %v809 = vunpack.c.l.b16 %v166
    %v810 = vunpack.c.h.b16 %v166
    %v811 = vunpack.c.l.b16 %v167
    %v812 = vunpack.c.h.b16 %v167
    %v813 = vunpack.c.l.b16 %v168
    %v814 = vunpack.c.h.b16 %v168
    %v815 = vunpack.c.l.b16 %v169
    %v816 = vunpack.c.h.b16 %v169
    %v817 = vunpack.c.l.b16 %v170
    %v818 = vunpack.c.h.b16 %v170
    %v819 = vunpack.c.l.b16 %v171
    %v820 = vunpack.c.h.b16 %v171
    %v821 = vunpack.c.l.b16 %v172
    %v822 = vunpack.c.h.b16 %v172
    %v823 = vunpack.c.l.b16 %v173
    %v824 = vunpack.c.h.b16 %v173
    %v825 = vunpack.c.l.b16 %v174
    %v826 = vunpack.c.h.b16 %v174
    %v827 = vunpack.c.l.b16 %v175
    %v828 = vunpack.c.h.b16 %v175
    %v829 = vunpack.c.l.b16 %v176
    %v830 = vunpack.c.h.b16 %v176
    %v831 = vunpack.c.l.b16 %v177
    %v832 = vunpack.c.h.b16 %v177
    %v833 = vunpack.c.l.b16 %v178
    %v834 = vunpack.c.h.b16 %v178
    %v835 = vunpack.c.l.b16 %v179
    %v836 = vunpack.c.h.b16 %v179
    %v837 = vunpack.c.l.b16 %v180
    %v838 = vunpack.c.h.b16 %v180
    %v839 = vunpack.c.l.b16 %v181
    %v840 = vunpack.c.h.b16 %v181
    %v841 = vunpack.c.l.b16 %v182
    %v842 = vunpack.c.h.b16 %v182
    %v843 = vunpack.c.l.b16 %v183
    %v844 = vunpack.c.h.b16 %v183
    %v845 = vunpack.c.l.b16 %v184
    %v846 = vunpack.c.h.b16 %v184
    %v847 = vunpack.c.l.b16 %v185
    %v848 = vunpack.c.h.b16 %v185
    %v849 = vunpack.c.l.b16 %v186
    %v850 = vunpack.c.h.b16 %v186
    %v851 = vunpack.c.l.b16 %v187
    %v852 = vunpack.c.h.b16 %v187
    %v853 = vunpack.c.l.b16 %v188
    %v854 = vunpack.c.h.b16 %v188
    %v855 = vunpack.c.l.b16 %v189
    %v856 = vunpack.c.h.b16 %v189
    %v857 = vunpack.c.l.b16 %v190
    %v858 = vunpack.c.h.b16 %v190
    %v859 = vunpack.c.l.b16 %v191
    %v860 = vunpack.c.h.b16 %v191
    %v861 = vunpack.c.l.b16 %v192
    %v862 = vunpack.c.h.b16 %v192
    %v863 = vunpack.c.l.b16 %v193
    %v864 = vunpack.c.h.b16 %v193
    %v865 = vunpack.c.l.b16 %v194
    %v866 = vunpack.c.h.b16 %v194
    %v867 = vunpack.c.l.b16 %v195
    %v868 = vunpack.c.h.b16 %v195
    %v869 = vunpack.c.l.b16 %v196
    %v870 = vunpack.c.h.b16 %v196
    %v871 = vunpack.c.l.b16 %v197
    %v872 = vunpack.c.h.b16 %v197
    %v873 = vunpack.c.l.b16 %v198
    %v874 = vunpack.c.h.b16 %v198
    %v875 = vunpack.c.l.b16 %v199
    %v876 = vunpack.c.h.b16 %v199
    %v877 = vunpack.c.l.b16 %v200
    %v878 = vunpack.c.h.b16 %v200
    %v879 = vunpack.c.l.b16 %v201
    %v880 = vunpack.c.h.b16 %v201
    %v881 = vunpack.c.l.b16 %v202
    %v882 = vunpack.c.h.b16 %v202
    %v883 = vunpack.c.l.b16 %v203
    %v884 = vunpack.c.h.b16 %v203
    %v885 = vunpack.c.l.b16 %v204
    %v886 = vunpack.c.h.b16 %v204
    %v887 = vunpack.c.l.b16 %v205
    %v888 = vunpack.c.h.b16 %v205
    %v889 = vunpack.c.l.b16 %v206
    %v890 = vunpack.c.h.b16 %v206
    %v891 = vunpack.c.l.b16 %v207
    %v892 = vunpack.c.h.b16 %v207
    %v893 = vunpack.c.l.b16 %v208
    %v894 = vunpack.c.h.b16 %v208
    %v895 = vunpack.c.l.b16 %v209
    %v896 = vunpack.c.h.b16 %v209
    %v897 = vunpack.c.l.b16 %v210
    %v898 = vunpack.c.h.b16 %v210
    %v899 = vunpack.c.l.b16 %v211
    %v900 = vunpack.c.h.b16 %v211
    %v901 = vunpack.c.l.b16 %v212
    %v902 = vunpack.c.h.b16 %v212
    %v903 = vunpack.c.l.b16 %v213
    %v904 = vunpack.c.h.b16 %v213
    %v905 = vunpack.c.l.b16 %v214
    %v906 = vunpack.c.h.b16 %v214
    %v907 = vunpack.c.l.b16 %v215
    %v908 = vunpack.c.h.b16 %v215
    %v909 = vunpack.c.l.b16 %v216
    %v910 = vunpack.c.h.b16 %v216
    %v911 = vunpack.c.l.b16 %v217
    %v912 = vunpack.c.h.b16 %v217
    %v913 = vunpack.c.l.b16 %v218
    %v914 = vunpack.c.h.b16 %v218
    %v915 = vunpack.c.l.b16 %v219
    %v916 = vunpack.c.h.b16 %v219
    %v917 = vunpack.c.l.b16 %v220
    %v918 = vunpack.c.h.b16 %v220
    %v919 = vunpack.c.l.b16 %v221
    %v920 = vunpack.c.h.b16 %v221
    %v921 = vunpack.c.l.b16 %v222
    %v922 = vunpack.c.h.b16 %v222
    %v923 = vunpack.c.l.b16 %v223
    %v924 = vunpack.c.h.b16 %v223
    %v925 = vunpack.c.l.b16 %v224
    %v926 = vunpack.c.h.b16 %v224
    %v927 = vunpack.c.l.b16 %v225
    %v928 = vunpack.c.h.b16 %v225
    %v929 = vunpack.c.l.b16 %v226
    %v930 = vunpack.c.h.b16 %v226
    %v931 = vunpack.c.l.b16 %v227
    %v932 = vunpack.c.h.b16 %v227
    %v933 = vunpack.c.l.b16 %v228
    %v934 = vunpack.c.h.b16 %v228
    %v935 = vunpack.c.l.b16 %v229
    %v936 = vunpack.c.h.b16 %v229
    %v937 = vunpack.c.l.b16 %v230
    %v938 = vunpack.c.h.b16 %v230
    %v939 = vunpack.c.l.b16 %v231
    %v940 = vunpack.c.h.b16 %v231
    %v941 = vunpack.c.l.b16 %v232
    %v942 = vunpack.c.h.b16 %v232
    %v943 = vunpack.c.l.b16 %v233
    %v944 = vunpack.c.h.b16 %v233
    %v945 = vunpack.c.l.b16 %v234
    %v946 = vunpack.c.h.b16 %v234
    %v947 = vunpack.c.l.b16 %v235
    %v948 = vunpack.c.h.b16 %v235
    %v949 = vunpack.c.l.b16 %v236
    %v950 = vunpack.c.h.b16 %v236
    %v951 = vunpack.c.l.b16 %v237
    %v952 = vunpack.c.h.b16 %v237
    %v953 = vunpack.c.l.b16 %v238
    %v954 = vunpack.c.h.b16 %v238
    %v955 = vunpack.c.l.b16 %v239
    %v956 = vunpack.c.h.b16 %v239
    %v957 = vunpack.c.l.b16 %v240
    %v958 = vunpack.c.h.b16 %v240
    %v959 = vunpack.c.l.b16 %v241
    %v960 = vunpack.c.h.b16 %v241
    %v961 = vunpack.c.l.b16 %v242
    %v962 = vunpack.c.h.b16 %v242
    %v963 = vunpack.c.l.b16 %v243
    %v964 = vunpack.c.h.b16 %v243
    %v965 = vunpack.c.l.b16 %v244
    %v966 = vunpack.c.h.b16 %v244
    %v967 = vunpack.c.l.b16 %v245
    %v968 = vunpack.c.h.b16 %v245
    %v969 = vunpack.c.l.b16 %v246
    %v970 = vunpack.c.h.b16 %v246
    %v971 = vunpack.c.l.b16 %v247
    %v972 = vunpack.c.h.b16 %v247
    %v973 = vunpack.c.l.b16 %v248
    %v974 = vunpack.c.h.b16 %v248
    %v975 = vunpack.c.l.b16 %v249
    %v976 = vunpack.c.h.b16 %v249
    %v977 = vunpack.c.l.b16 %v250
    %v978 = vunpack.c.h.b16 %v250
    %v979 = vunpack.c.l.b16 %v251
    %v980 = vunpack.c.h.b16 %v251
    %v981 = vunpack.c.l.b16 %v252
    %v982 = vunpack.c.h.b16 %v252
    %v983 = vunpack.c.l.b16 %v253
    %v984 = vunpack.c.h.b16 %v253
    %v985 = vunpack.c.l.b16 %v254
    %v986 = vunpack.c.h.b16 %v254
    %v987 = vunpack.c.l.b16 %v255
    %v988 = vunpack.c.h.b16 %v255
    %v989 = vunpack.c.l.b16 %v256
    %v990 = vunpack.c.h.b16 %v256
    %v991 = vunpack.c.l.b16 %v257
    %v992 = vunpack.c.h.b16 %v257
    %v993 = vunpack.c.l.b16 %v258
    %v994 = vunpack.c.h.b16 %v258
    %v995 = vunpack.c.l.b16 %v259
    %v996 = vunpack.c.h.b16 %v259
    %v997 = vunpack.c.l.b16 %v260
    %v998 = vunpack.c.h.b16 %v260
    %v999 = vunpack.c.l.b16 %v261
    %v1000 = vunpack.c.h.b16 %v261
    %v1001 = vunpack.c.l.b16 %v262
    %v1002 = vunpack.c.h.b16 %v262
    %v1003 = vunpack.c.l.b16 %v263
    %v1004 = vunpack.c.h.b16 %v263
    %v1005 = vunpack.c.l.b16 %v264
    %v1006 = vunpack.c.h.b16 %v264
    %v1007 = vunpack.c.l.b16 %v265
    %v1008 = vunpack.c.h.b16 %v265
    %v1009 = vunpack.c.l.b16 %v266
    %v1010 = vunpack.c.h.b16 %v266
    %v1011 = vunpack.c.l.b16 %v267
    %v1012 = vunpack.c.h.b16 %v267
    %v1013 = vunpack.c.l.b16 %v268
    %v1014 = vunpack.c.h.b16 %v268
    %v1015 = vunpack.c.l.b16 %v269
    %v1016 = vunpack.c.h.b16 %v269
    %v1017 = vunpack.c.l.b16 %v270
    %v1018 = vunpack.c.h.b16 %v270
    %v1019 = vunpack.c.l.b16 %v271
    %v1020 = vunpack.c.h.b16 %v271
    %v1021 = vunpack.c.l.b16 %v272
    %v1022 = vunpack.c.h.b16 %v272
    %v1023 = vunpack.c.l.b16 %v273
    %v1024 = vunpack.c.h.b16 %v273
    %v1025 = vunpack.c.l.b16 %v274
    %v1026 = vunpack.c.h.b16 %v274
    %v1027 = vunpack.c.l.b16 %v275
    %v1028 = vunpack.c.h.b16 %v275
    %v1029 = vunpack.c.l.b16 %v276
    %v1030 = vunpack.c.h.b16 %v276
    %v1031 = vunpack.c.l.b16 %v277
    %v1032 = vunpack.c.h.b16 %v277
    %v1033 = vunpack.c.l.b16 %v278
    %v1034 = vunpack.c.h.b16 %v278
    %v1035 = vunpack.c.l.b16 %v279
    %v1036 = vunpack.c.h.b16 %v279
    %v1037 = vunpack.c.l.b16 %v280
    %v1038 = vunpack.c.h.b16 %v280
    %v1039 = vunpack.c.l.b16 %v281
    %v1040 = vunpack.c.h.b16 %v281
    %v1041 = vunpack.c.l.b16 %v282
    %v1042 = vunpack.c.h.b16 %v282
    %v1043 = vunpack.c.l.b16 %v283
    %v1044 = vunpack.c.h.b16 %v283
    %v1045 = vunpack.c.l.b16 %v284
    %v1046 = vunpack.c.h.b16 %v284
    %v1047 = vunpack.c.l.b16 %v285
    %v1048 = vunpack.c.h.b16 %v285
    %v1049 = vunpack.c.l.b16 %v286
    %v1050 = vunpack.c.h.b16 %v286
    %v1051 = vunpack.c.l.b16 %v287
    %v1052 = vunpack.c.h.b16 %v287
    %v1053 = vunpack.c.l.b16 %v288
    %v1054 = vunpack.c.h.b16 %v288
    %v1055 = vunpack.c.l.b16 %v289
    %v1056 = vunpack.c.h.b16 %v289
    %v1057 = vunpack.c.l.b16 %v290
    %v1058 = vunpack.c.h.b16 %v290
    %v1059 = vunpack.c.l.b16 %v291
    %v1060 = vunpack.c.h.b16 %v291
    %v1061 = vunpack.c.l.b16 %v292
    %v1062 = vunpack.c.h.b16 %v292
    %v1063 = vunpack.c.l.b16 %v293
    %v1064 = vunpack.c.h.b16 %v293
    %v1065 = vunpack.c.l.b16 %v294
    %v1066 = vunpack.c.h.b16 %v294
    %v1067 = vunpack.c.l.b16 %v295
    %v1068 = vunpack.c.h.b16 %v295
    %v1069 = vunpack.c.l.b16 %v296
    %v1070 = vunpack.c.h.b16 %v296
    %v1071 = vunpack.c.l.b16 %v297
    %v1072 = vunpack.c.h.b16 %v297
    %v1073 = vunpack.c.l.b16 %v298
    %v1074 = vunpack.c.h.b16 %v298
    %v1075 = vunpack.c.l.b16 %v299
    %v1076 = vunpack.c.h.b16 %v299
    %v1077 = vunpack.c.l.b16 %v300
    %v1078 = vunpack.c.h.b16 %v300
    %v1079 = vunpack.c.l.b16 %v301
    %v1080 = vunpack.c.h.b16 %v301
    %v1081 = vunpack.c.l.b16 %v302
    %v1082 = vunpack.c.h.b16 %v302
    %v1083 = vunpack.c.l.b16 %v303
    %v1084 = vunpack.c.h.b16 %v303
    %v1085 = vunpack.c.l.b16 %v304
    %v1086 = vunpack.c.h.b16 %v304
    %v1087 = vunpack.c.l.b16 %v305
    %v1088 = vunpack.c.h.b16 %v305
    %v1089 = vunpack.c.l.b16 %v306
    %v1090 = vunpack.c.h.b16 %v306
    %v1091 = vunpack.c.l.b16 %v307
    %v1092 = vunpack.c.h.b16 %v307
    %v1093 = vunpack.c.l.b16 %v308
    %v1094 = vunpack.c.h.b16 %v308
    %v1095 = vunpack.c.l.b16 %v309
    %v1096 = vunpack.c.h.b16 %v309
    %v1097 = vunpack.c.l.b16 %v310
    %v1098 = vunpack.c.h.b16 %v310
    %v1099 = vunpack.c.l.b16 %v311
    %v1100 = vunpack.c.h.b16 %v311
    %v1101 = vunpack.c.l.b16 %v312
    %v1102 = vunpack.c.h.b16 %v312
    %v1103 = vunpack.c.l.b16 %v313
    %v1104 = vunpack.c.h.b16 %v313
    %v1105 = vunpack.c.l.b16 %v314
    %v1106 = vunpack.c.h.b16 %v314
    %v1107 = vunpack.c.l.b16 %v315
    %v1108 = vunpack.c.h.b16 %v315
    %v1109 = vunpack.c.l.b16 %v316
    %v1110 = vunpack.c.h.b16 %v316
    %v1111 = vunpack.c.l.b16 %v317
    %v1112 = vunpack.c.h.b16 %v317
    %v1113 = vunpack.c.l.b16 %v318
    %v1114 = vunpack.c.h.b16 %v318
    %v1115 = vunpack.c.l.b16 %v319
    %v1116 = vunpack.c.h.b16 %v319
    %v1117 = vunpack.c.l.b16 %v320
    %v1118 = vunpack.c.h.b16 %v320
    %v1119 = vunpack.c.l.b16 %v321
    %v1120 = vunpack.c.h.b16 %v321
    %v1121 = vunpack.c.l.b16 %v322
    %v1122 = vunpack.c.h.b16 %v322
    %v1123 = vunpack.c.l.b16 %v323
    %v1124 = vunpack.c.h.b16 %v323
    %v1125 = vunpack.c.l.b16 %v324
    %v1126 = vunpack.c.h.b16 %v324
    %v1127 = vunpack.c.l.b16 %v325
    %v1128 = vunpack.c.h.b16 %v325
    %v1129 = vunpack.c.l.b16 %v326
    %v1130 = vunpack.c.h.b16 %v326
    %v1131 = vunpack.c.l.b16 %v327
    %v1132 = vunpack.c.h.b16 %v327
    %v1133 = vunpack.c.l.b16 %v328
    %v1134 = vunpack.c.h.b16 %v328
    %v1135 = vunpack.c.l.b16 %v329
    %v1136 = vunpack.c.h.b16 %v329
    %v1137 = vunpack.c.l.b16 %v330
    %v1138 = vunpack.c.h.b16 %v330
    %v1139 = vunpack.c.l.b16 %v331
    %v1140 = vunpack.c.h.b16 %v331
    %v1141 = vunpack.c.l.b16 %v332
    %v1142 = vunpack.c.h.b16 %v332
    %v1143 = vunpack.c.l.b16 %v333
    %v1144 = vunpack.c.h.b16 %v333
    %v1145 = vunpack.c.l.b16 %v334
    %v1146 = vunpack.c.h.b16 %v334
    %v1147 = vunpack.c.l.b16 %v335
    %v1148 = vunpack.c.h.b16 %v335
    %v1149 = vunpack.c.l.b16 %v336
    %v1150 = vunpack.c.h.b16 %v336
    %v1151 = vunpack.c.l.b16 %v337
    %v1152 = vunpack.c.h.b16 %v337
    %v1153 = vunpack.c.l.b16 %v338
    %v1154 = vunpack.c.h.b16 %v338
    %v1155 = vunpack.c.l.b16 %v339
    %v1156 = vunpack.c.h.b16 %v339
    %v1157 = vunpack.c.l.b16 %v340
    %v1158 = vunpack.c.h.b16 %v340
    %v1159 = vunpack.c.l.b16 %v341
    %v1160 = vunpack.c.h.b16 %v341
    %v1161 = vunpack.c.l.b16 %v342
    %v1162 = vunpack.c.h.b16 %v342
    %v1163 = vunpack.c.l.b16 %v343
    %v1164 = vunpack.c.h.b16 %v343
    %v1165 = vunpack.c.l.b16 %v344
    %v1166 = vunpack.c.h.b16 %v344
    %v1167 = vunpack.c.l.b16 %v345
    %v1168 = vunpack.c.h.b16 %v345
    %v1169 = vunpack.c.l.b16 %v346
    %v1170 = vunpack.c.h.b16 %v346
    %v1171 = vpack.c.b16 %v667, %v659
    %v1172 = vpack.c.b16 %v668, %v660
    %v1173 = vpack.c.b16 %v669, %v661
    %v1174 = vpack.c.b16 %v670, %v662
    %v1175 = vpack.c.b16 %v671, %v663
    %v1176 = vpack.c.b16 %v672, %v664
    %v1177 = vpack.c.b16 %v673, %v665
    %v1178 = vpack.c.b16 %v674, %v666
    %v1179 = vpack.c.b16 %v683, %v675
    %v1180 = vpack.c.b16 %v684, %v676
    %v1181 = vpack.c.b16 %v685, %v677
    %v1182 = vpack.c.b16 %v686, %v678
    %v1183 = vpack.c.b16 %v687, %v679
    %v1184 = vpack.c.b16 %v688, %v680
    %v1185 = vpack.c.b16 %v689, %v681
    %v1186 = vpack.c.b16 %v690, %v682
    %v1187 = vpack.c.b16 %v699, %v691
    %v1188 = vpack.c.b16 %v700, %v692
    %v1189 = vpack.c.b16 %v701, %v693
    %v1190 = vpack.c.b16 %v702, %v694
    %v1191 = vpack.c.b16 %v703, %v695
    %v1192 = vpack.c.b16 %v704, %v696
    %v1193 = vpack.c.b16 %v705, %v697
    %v1194 = vpack.c.b16 %v706, %v698
    %v1195 = vpack.c.b16 %v715, %v707
    %v1196 = vpack.c.b16 %v716, %v708
    %v1197 = vpack.c.b16 %v717, %v709
    %v1198 = vpack.c.b16 %v718, %v710
    %v1199 = vpack.c.b16 %v719, %v711
    %v1200 = vpack.c.b16 %v720, %v712
    %v1201 = vpack.c.b16 %v721, %v713
    %v1202 = vpack.c.b16 %v722, %v714
    %v1203 = vpack.c.b16 %v731, %v723
    %v1204 = vpack.c.b16 %v732, %v724
    %v1205 = vpack.c.b16 %v733, %v725
    %v1206 = vpack.c.b16 %v734, %v726
    %v1207 = vpack.c.b16 %v735, %v727
    %v1208 = vpack.c.b16 %v736, %v728
    %v1209 = vpack.c.b16 %v737, %v729
    %v1210 = vpack.c.b16 %v738, %v730
    %v1211 = vpack.c.b16 %v747, %v739
    %v1212 = vpack.c.b16 %v748, %v740
    %v1213 = vpack.c.b16 %v749, %v741
    %v1214 = vpack.c.b16 %v750, %v742
    %v1215 = vpack.c.b16 %v751, %v743
    %v1216 = vpack.c.b16 %v752, %v744
    %v1217 = vpack.c.b16 %v753, %v745
    %v1218 = vpack.c.b16 %v754, %v746
    %v1219 = vpack.c.b16 %v763, %v755
    %v1220 = vpack.c.b16 %v764, %v756
    %v1221 = vpack.c.b16 %v765, %v757
    %v1222 = vpack.c.b16 %v766, %v758
    %v1223 = vpack.c.b16 %v767, %v759
    %v1224 = vpack.c.b16 %v768, %v760
    %v1225 = vpack.c.b16 %v769, %v761
    %v1226 = vpack.c.b16 %v770, %v762
    %v1227 = vpack.c.b16 %v779, %v771
    %v1228 = vpack.c.b16 %v780, %v772
    %v1229 = vpack.c.b16 %v781, %v773
    %v1230 = vpack.c.b16 %v782, %v774
    %v1231 = vpack.c.b16 %v783, %v775
    %v1232 = vpack.c.b16 %v784, %v776
    %v1233 = vpack.c.b16 %v785, %v777
    %v1234 = vpack.c.b16 %v786, %v778
    %v1235 = vpack.c.b16 %v795, %v787
    %v1236 = vpack.c.b16 %v796, %v788
    %v1237 = vpack.c.b16 %v797, %v789
    %v1238 = vpack.c.b16 %v798, %v790
    %v1239 = vpack.c.b16 %v799, %v791
    %v1240 = vpack.c.b16 %v800, %v792
    %v1241 = vpack.c.b16 %v801, %v793
    %v1242 = vpack.c.b16 %v802, %v794
    %v1243 = vpack.c.b16 %v811, %v803
    %v1244 = vpack.c.b16 %v812, %v804
    %v1245 = vpack.c.b16 %v813, %v805
    %v1246 = vpack.c.b16 %v814, %v806
    %v1247 = vpack.c.b16 %v815, %v807
    %v1248 = vpack.c.b16 %v816, %v808
    %v1249 = vpack.c.b16 %v817, %v809
    %v1250 = vpack.c.b16 %v818, %v810
    %v1251 = vpack.c.b16 %v827, %v819
    %v1252 = vpack.c.b16 %v828, %v820
    %v1253 = vpack.c.b16 %v829, %v821
    %v1254 = vpack.c.b16 %v830, %v822
    %v1255 = vpack.c.b16 %v831, %v823
    %v1256 = vpack.c.b16 %v832, %v824
    %v1257 = vpack.c.b16 %v833, %v825
    %v1258 = vpack.c.b16 %v834, %v826
    %v1259 = vpack.c.b16 %v843, %v835
    %v1260 = vpack.c.b16 %v844, %v836
    %v1261 = vpack.c.b16 %v845, %v837
    %v1262 = vpack.c.b16 %v846, %v838
    %v1263 = vpack.c.b16 %v847, %v839
    %v1264 = vpack.c.b16 %v848, %v840
    %v1265 = vpack.c.b16 %v849, %v841
    %v1266 = vpack.c.b16 %v850, %v842
    %v1267 = vpack.c.b16 %v859, %v851
    %v1268 = vpack.c.b16 %v860, %v852
    %v1269 = vpack.c.b16 %v861, %v853
    %v1270 = vpack.c.b16 %v862, %v854
    %v1271 = vpack.c.b16 %v863, %v855
    %v1272 = vpack.c.b16 %v864, %v856
    %v1273 = vpack.c.b16 %v865, %v857
    %v1274 = vpack.c.b16 %v866, %v858
    %v1275 = vpack.c.b16 %v875, %v867
    %v1276 = vpack.c.b16 %v876, %v868
    %v1277 = vpack.c.b16 %v877, %v869
    %v1278 = vpack.c.b16 %v878, %v870
    %v1279 = vpack.c.b16 %v879, %v871
    %v1280 = vpack.c.b16 %v880, %v872
    %v1281 = vpack.c.b16 %v881, %v873
    %v1282 = vpack.c.b16 %v882, %v874
    %v1283 = vpack.c.b16 %v891, %v883
    %v1284 = vpack.c.b16 %v892, %v884
    %v1285 = vpack.c.b16 %v893, %v885
    %v1286 = vpack.c.b16 %v894, %v886
    %v1287 = vpack.c.b16 %v895, %v887
    %v1288 = vpack.c.b16 %v896, %v888
    %v1289 = vpack.c.b16 %v897, %v889
    %v1290 = vpack.c.b16 %v898, %v890
    %v1291 = vpack.c.b16 %v907, %v899
    %v1292 = vpack.c.b16 %v908, %v900
    %v1293 = vpack.c.b16 %v909, %v901
    %v1294 = vpack.c.b16 %v910, %v902
    %v1295 = vpack.c.b16 %v911, %v903
    %v1296 = vpack.c.b16 %v912, %v904
    %v1297 = vpack.c.b16 %v913, %v905
    %v1298 = vpack.c.b16 %v914, %v906
    %v1299 = vpack.c.b16 %v923, %v915
    %v1300 = vpack.c.b16 %v924, %v916
    %v1301 = vpack.c.b16 %v925, %v917
    %v1302 = vpack.c.b16 %v926, %v918
    %v1303 = vpack.c.b16 %v927, %v919
    %v1304 = vpack.c.b16 %v928, %v920
    %v1305 = vpack.c.b16 %v929, %v921
    %v1306 = vpack.c.b16 %v930, %v922
    %v1307 = vpack.c.b16 %v939, %v931
    %v1308 = vpack.c.b16 %v940, %v932
    %v1309 = vpack.c.b16 %v941, %v933
    %v1310 = vpack.c.b16 %v942, %v934
    %v1311 = vpack.c.b16 %v943, %v935
    %v1312 = vpack.c.b16 %v944, %v936
    %v1313 = vpack.c.b16 %v945, %v937
    %v1314 = vpack.c.b16 %v946, %v938
    %v1315 = vpack.c.b16 %v955, %v947
    %v1316 = vpack.c.b16 %v956, %v948
    %v1317 = vpack.c.b16 %v957, %v949
    %v1318 = vpack.c.b16 %v958, %v950
    %v1319 = vpack.c.b16 %v959, %v951
    %v1320 = vpack.c.b16 %v960, %v952
    %v1321 = vpack.c.b16 %v961, %v953
    %v1322 = vpack.c.b16 %v962, %v954
    %v1323 = vpack.c.b16 %v971, %v963
    %v1324 = vpack.c.b16 %v972, %v964
    %v1325 = vpack.c.b16 %v973, %v965
    %v1326 = vpack.c.b16 %v974, %v966
    %v1327 = vpack.c.b16 %v975, %v967
    %v1328 = vpack.c.b16 %v976, %v968
    %v1329 = vpack.c.b16 %v977, %v969
    %v1330 = vpack.c.b16 %v978, %v970
    %v1331 = vpack.c.b16 %v987, %v979
    %v1332 = vpack.c.b16 %v988, %v980
    %v1333 = vpack.c.b16 %v989, %v981
    %v1334 = vpack.c.b16 %v990, %v982
    %v1335 = vpack.c.b16 %v991, %v983
    %v1336 = vpack.c.b16 %v992, %v984
    %v1337 = vpack.c.b16 %v993, %v985
    %v1338 = vpack.c.b16 %v994, %v986
    %v1339 = vpack.c.b16 %v1003, %v995
    %v1340 = vpack.c.b16 %v1004, %v996
    %v1341 = vpack.c.b16 %v1005, %v997
    %v1342 = vpack.c.b16 %v1006, %v998
    %v1343 = vpack.c.b16 %v1007, %v999
    %v1344 = vpack.c.b16 %v1008, %v1000
    %v1345 = vpack.c.b16 %v1009, %v1001
    %v1346 = vpack.c.b16 %v1010, %v1002
    %v1347 = vpack.c.b16 %v1019, %v1011
    %v1348 = vpack.c.b16 %v1020, %v1012
    %v1349 = vpack.c.b16 %v1021, %v1013
    %v1350 = vpack.c.b16 %v1022, %v1014
    %v1351 = vpack.c.b16 %v1023, %v1015
    %v1352 = vpack.c.b16 %v1024, %v1016
    %v1353 = vpack.c.b16 %v1025, %v1017
    %v1354 = vpack.c.b16 %v1026, %v1018
    %v1355 = vpack.c.b16 %v1035, %v1027
    %v1356 = vpack.c.b16 %v1036, %v1028
    %v1357 = vpack.c.b16 %v1037, %v1029
    %v1358 = vpack.c.b16 %v1038, %v1030
    %v1359 = vpack.c.b16 %v1039, %v1031
    %v1360 = vpack.c.b16 %v1040, %v1032
    %v1361 = vpack.c.b16 %v1041, %v1033
    %v1362 = vpack.c.b16 %v1042, %v1034
    %v1363 = vpack.c.b16 %v1051, %v1043
    %v1364 = vpack.c.b16 %v1052, %v1044
    %v1365 = vpack.c.b16 %v1053, %v1045
    %v1366 = vpack.c.b16 %v1054, %v1046
    %v1367 = vpack.c.b16 %v1055, %v1047
    %v1368 = vpack.c.b16 %v1056, %v1048
    %v1369 = vpack.c.b16 %v1057, %v1049
    %v1370 = vpack.c.b16 %v1058, %v1050
    %v1371 = vpack.c.b16 %v1067, %v1059
    %v1372 = vpack.c.b16 %v1068, %v1060
    %v1373 = vpack.c.b16 %v1069, %v1061
    %v1374 = vpack.c.b16 %v1070, %v1062
    %v1375 = vpack.c.b16 %v1071, %v1063
    %v1376 = vpack.c.b16 %v1072, %v1064
    %v1377 = vpack.c.b16 %v1073, %v1065
    %v1378 = vpack.c.b16 %v1074, %v1066
    %v1379 = vpack.c.b16 %v1083, %v1075
    %v1380 = vpack.c.b16 %v1084, %v1076
    %v1381 = vpack.c.b16 %v1085, %v1077
    %v1382 = vpack.c.b16 %v1086, %v1078
    %v1383 = vpack.c.b16 %v1087, %v1079
    %v1384 = vpack.c.b16 %v1088, %v1080
    %v1385 = vpack.c.b16 %v1089, %v1081
    %v1386 = vpack.c.b16 %v1090, %v1082
    %v1387 = vpack.c.b16 %v1099, %v1091
    %v1388 = vpack.c.b16 %v1100, %v1092
    %v1389 = vpack.c.b16 %v1101, %v1093
    %v1390 = vpack.c.b16 %v1102, %v1094
    %v1391 = vpack.c.b16 %v1103, %v1095
    %v1392 = vpack.c.b16 %v1104, %v1096
    %v1393 = vpack.c.b16 %v1105, %v1097
    %v1394 = vpack.c.b16 %v1106, %v1098
    %v1395 = vpack.c.b16 %v1115, %v1107
    %v1396 = vpack.c.b16 %v1116, %v1108
    %v1397 = vpack.c.b16 %v1117, %v1109
    %v1398 = vpack.c.b16 %v1118, %v1110
    %v1399 = vpack.c.b16 %v1119, %v1111
    %v1400 = vpack.c.b16 %v1120, %v1112
    %v1401 = vpack.c.b16 %v1121, %v1113
    %v1402 = vpack.c.b16 %v1122, %v1114
    %v1403 = vpack.c.b16 %v1131, %v1123
    %v1404 = vpack.c.b16 %v1132, %v1124
    %v1405 = vpack.c.b16 %v1133, %v1125
    %v1406 = vpack.c.b16 %v1134, %v1126
    %v1407 = vpack.c.b16 %v1135, %v1127
    %v1408 = vpack.c.b16 %v1136, %v1128
    %v1409 = vpack.c.b16 %v1137, %v1129
    %v1410 = vpack.c.b16 %v1138, %v1130
    %v1411 = vpack.c.b16 %v1147, %v1139
    %v1412 = vpack.c.b16 %v1148, %v1140
    %v1413 = vpack.c.b16 %v1149, %v1141
    %v1414 = vpack.c.b16 %v1150, %v1142
    %v1415 = vpack.c.b16 %v1151, %v1143
    %v1416 = vpack.c.b16 %v1152, %v1144
    %v1417 = vpack.c.b16 %v1153, %v1145
    %v1418 = vpack.c.b16 %v1154, %v1146
    %v1419 = vpack.c.b16 %v1163, %v1155
    %v1420 = vpack.c.b16 %v1164, %v1156
    %v1421 = vpack.c.b16 %v1165, %v1157
    %v1422 = vpack.c.b16 %v1166, %v1158
    %v1423 = vpack.c.b16 %v1167, %v1159
    %v1424 = vpack.c.b16 %v1168, %v1160
    %v1425 = vpack.c.b16 %v1169, %v1161
    %v1426 = vpack.c.b16 %v1170, %v1162
    %1683 = vmatprep.subr.bf16.mxu0 %v1228
    %1684 = vmatpush1.bf16.msra.mxu0 %v1227
    %1685 = vmatprep.subr.bf16.mxu0 %v1220
    %1686 = vmatpush1.bf16.msra.mxu0 %v1219
    %1687 = vmatprep.subr.bf16.mxu0 %v1212
    %1688 = vmatpush1.bf16.msra.mxu0 %v1211
    %1689 = vmatprep.subr.bf16.mxu0 %v1204
    %1690 = vmatpush1.bf16.msra.mxu0 %v1203
    %1691 = vmatprep.subr.bf16.mxu0 %v1196
    %1692 = vmatpush1.bf16.msra.mxu0 %v1195
    %1693 = vmatprep.subr.bf16.mxu0 %v1188
    %1694 = vmatpush1.bf16.msra.mxu0 %v1187
    %1695 = vmatprep.subr.bf16.mxu0 %v1180
    %1696 = vmatpush1.bf16.msra.mxu0 %v1179
    %1697 = vmatprep.subr.bf16.mxu0 %v1172
    %1698 = vmatpush1.bf16.msra.mxu0 %v1171
    %1699 = vmatprep.subr.bf16.mxu0 %v1292
    %1700 = vmatpush2.bf16.msra.mxu0 %v1291
    %1701 = vmatprep.subr.bf16.mxu0 %v1284
    %1702 = vmatpush2.bf16.msra.mxu0 %v1283
    %1703 = vmatprep.subr.bf16.mxu0 %v1276
    %1704 = vmatpush2.bf16.msra.mxu0 %v1275
    %1705 = vmatprep.subr.bf16.mxu0 %v1268
    %1706 = vmatpush2.bf16.msra.mxu0 %v1267
    %1707 = vmatprep.subr.bf16.mxu0 %v1260
    %1708 = vmatpush2.bf16.msra.mxu0 %v1259
    %1709 = vmatprep.subr.bf16.mxu0 %v1252
    %1710 = vmatpush2.bf16.msra.mxu0 %v1251
    %1711 = vmatprep.subr.bf16.mxu0 %v1244
    %1712 = vmatpush2.bf16.msra.mxu0 %v1243
    %1713 = vmatprep.subr.bf16.mxu0 %v1236
    %1714 = vmatpush2.bf16.msra.mxu0 %v1235
    %1715 = vmatprep.mubr.bf16.mxu0 %v396
    %1716 = vmatmul.mubr.bf16.gmra.mxu0 %v395
    %v1717 = vpop.f32.mrf.mxu0
    %v1718 = vadd.f32 %v352, %v1717
    %v1719 = vpop.f32.mrf.mxu0
    %v1720 = vadd.f32 %v356, %v1719
    %v1721 = vpop.f32.mrf.mxu0
    %v1722 = vpop.f32.mrf.mxu0
    %1723 = vdwg.mxu0
    %1724 = vmatprep.subr.bf16.mxu0 %v1356
    %1725 = vmatpush1.bf16.msra.mxu0 %v1355
    %1726 = vmatprep.subr.bf16.mxu0 %v1348
    %1727 = vmatpush1.bf16.msra.mxu0 %v1347
    %1728 = vmatprep.subr.bf16.mxu0 %v1340
    %1729 = vmatpush1.bf16.msra.mxu0 %v1339
    %1730 = vmatprep.subr.bf16.mxu0 %v1332
    %1731 = vmatpush1.bf16.msra.mxu0 %v1331
    %1732 = vmatprep.subr.bf16.mxu0 %v1324
    %1733 = vmatpush1.bf16.msra.mxu0 %v1323
    %1734 = vmatprep.subr.bf16.mxu0 %v1316
    %1735 = vmatpush1.bf16.msra.mxu0 %v1315
    %1736 = vmatprep.subr.bf16.mxu0 %v1308
    %1737 = vmatpush1.bf16.msra.mxu0 %v1307
    %1738 = vmatprep.subr.bf16.mxu0 %v1300
    %1739 = vmatpush1.bf16.msra.mxu0 %v1299
    %1740 = vmatprep.subr.bf16.mxu0 %v1420
    %1741 = vmatpush2.bf16.msra.mxu0 %v1419
    %1742 = vmatprep.subr.bf16.mxu0 %v1412
    %1743 = vmatpush2.bf16.msra.mxu0 %v1411
    %1744 = vmatprep.subr.bf16.mxu0 %v1404
    %1745 = vmatpush2.bf16.msra.mxu0 %v1403
    %1746 = vmatprep.subr.bf16.mxu0 %v1396
    %1747 = vmatpush2.bf16.msra.mxu0 %v1395
    %1748 = vmatprep.subr.bf16.mxu0 %v1388
    %1749 = vmatpush2.bf16.msra.mxu0 %v1387
    %1750 = vmatprep.subr.bf16.mxu0 %v1380
    %1751 = vmatpush2.bf16.msra.mxu0 %v1379
    %1752 = vmatprep.subr.bf16.mxu0 %v1372
    %1753 = vmatpush2.bf16.msra.mxu0 %v1371
    %1754 = vmatprep.subr.bf16.mxu0 %v1364
    %1755 = vmatpush2.bf16.msra.mxu0 %v1363
    %1756 = vmatprep.mubr.bf16.mxu0 %v398
    %1757 = vmatmul.mubr.bf16.gmra.mxu0 %v397
    %v1758 = vpop.f32.mrf.mxu0
    %v1759 = vadd.f32 %v1718, %v1758
    %v1760 = vpop.f32.mrf.mxu0
    %v1761 = vadd.f32 %v1720, %v1760
    %v1762 = vpop.f32.mrf.mxu0
    %v1763 = vpop.f32.mrf.mxu0
    %1764 = vdwg.mxu0
    %1765 = vmatprep.subr.bf16.mxu0 %v1230
    %1766 = vmatpush1.bf16.msra.mxu0 %v1229
    %1767 = vmatprep.subr.bf16.mxu0 %v1222
    %1768 = vmatpush1.bf16.msra.mxu0 %v1221
    %1769 = vmatprep.subr.bf16.mxu0 %v1214
    %1770 = vmatpush1.bf16.msra.mxu0 %v1213
    %1771 = vmatprep.subr.bf16.mxu0 %v1206
    %1772 = vmatpush1.bf16.msra.mxu0 %v1205
    %1773 = vmatprep.subr.bf16.mxu0 %v1198
    %1774 = vmatpush1.bf16.msra.mxu0 %v1197
    %1775 = vmatprep.subr.bf16.mxu0 %v1190
    %1776 = vmatpush1.bf16.msra.mxu0 %v1189
    %1777 = vmatprep.subr.bf16.mxu0 %v1182
    %1778 = vmatpush1.bf16.msra.mxu0 %v1181
    %1779 = vmatprep.subr.bf16.mxu0 %v1174
    %1780 = vmatpush1.bf16.msra.mxu0 %v1173
    %1781 = vmatprep.subr.bf16.mxu0 %v1294
    %1782 = vmatpush2.bf16.msra.mxu0 %v1293
    %1783 = vmatprep.subr.bf16.mxu0 %v1286
    %1784 = vmatpush2.bf16.msra.mxu0 %v1285
    %1785 = vmatprep.subr.bf16.mxu0 %v1278
    %1786 = vmatpush2.bf16.msra.mxu0 %v1277
    %1787 = vmatprep.subr.bf16.mxu0 %v1270
    %1788 = vmatpush2.bf16.msra.mxu0 %v1269
    %1789 = vmatprep.subr.bf16.mxu0 %v1262
    %1790 = vmatpush2.bf16.msra.mxu0 %v1261
    %1791 = vmatprep.subr.bf16.mxu0 %v1254
    %1792 = vmatpush2.bf16.msra.mxu0 %v1253
    %1793 = vmatprep.subr.bf16.mxu0 %v1246
    %1794 = vmatpush2.bf16.msra.mxu0 %v1245
    %1795 = vmatprep.subr.bf16.mxu0 %v1238
    %1796 = vmatpush2.bf16.msra.mxu0 %v1237
    %1797 = vmatprep.mubr.bf16.mxu0 %v396
    %1798 = vmatmul.mubr.bf16.gmra.mxu0 %v395
    %v1799 = vpop.f32.mrf.mxu0
    %v1800 = vadd.f32 %v360, %v1799
    %v1801 = vpop.f32.mrf.mxu0
    %v1802 = vadd.f32 %v364, %v1801
    %v1803 = vpop.f32.mrf.mxu0
    %v1804 = vpop.f32.mrf.mxu0
    %1805 = vdwg.mxu0
    %1806 = vmatprep.subr.bf16.mxu0 %v1358
    %1807 = vmatpush1.bf16.msra.mxu0 %v1357
    %1808 = vmatprep.subr.bf16.mxu0 %v1350
    %1809 = vmatpush1.bf16.msra.mxu0 %v1349
    %1810 = vmatprep.subr.bf16.mxu0 %v1342
    %1811 = vmatpush1.bf16.msra.mxu0 %v1341
    %1812 = vmatprep.subr.bf16.mxu0 %v1334
    %1813 = vmatpush1.bf16.msra.mxu0 %v1333
    %1814 = vmatprep.subr.bf16.mxu0 %v1326
    %1815 = vmatpush1.bf16.msra.mxu0 %v1325
    %1816 = vmatprep.subr.bf16.mxu0 %v1318
    %1817 = vmatpush1.bf16.msra.mxu0 %v1317
    %1818 = vmatprep.subr.bf16.mxu0 %v1310
    %1819 = vmatpush1.bf16.msra.mxu0 %v1309
    %1820 = vmatprep.subr.bf16.mxu0 %v1302
    %1821 = vmatpush1.bf16.msra.mxu0 %v1301
    %1822 = vmatprep.subr.bf16.mxu0 %v1422
    %1823 = vmatpush2.bf16.msra.mxu0 %v1421
    %1824 = vmatprep.subr.bf16.mxu0 %v1414
    %1825 = vmatpush2.bf16.msra.mxu0 %v1413
    %1826 = vmatprep.subr.bf16.mxu0 %v1406
    %1827 = vmatpush2.bf16.msra.mxu0 %v1405
    %1828 = vmatprep.subr.bf16.mxu0 %v1398
    %1829 = vmatpush2.bf16.msra.mxu0 %v1397
    %1830 = vmatprep.subr.bf16.mxu0 %v1390
    %1831 = vmatpush2.bf16.msra.mxu0 %v1389
    %1832 = vmatprep.subr.bf16.mxu0 %v1382
    %1833 = vmatpush2.bf16.msra.mxu0 %v1381
    %1834 = vmatprep.subr.bf16.mxu0 %v1374
    %1835 = vmatpush2.bf16.msra.mxu0 %v1373
    %1836 = vmatprep.subr.bf16.mxu0 %v1366
    %1837 = vmatpush2.bf16.msra.mxu0 %v1365
    %1838 = vmatprep.mubr.bf16.mxu0 %v398
    %1839 = vmatmul.mubr.bf16.gmra.mxu0 %v397
    %v1840 = vpop.f32.mrf.mxu0
    %v1841 = vadd.f32 %v1800, %v1840
    %v1842 = vpop.f32.mrf.mxu0
    %v1843 = vadd.f32 %v1802, %v1842
    %v1844 = vpop.f32.mrf.mxu0
    %v1845 = vpop.f32.mrf.mxu0
    %1846 = vdwg.mxu0
    %1847 = vmatprep.subr.bf16.mxu0 %v1232
    %1848 = vmatpush1.bf16.msra.mxu0 %v1231
    %1849 = vmatprep.subr.bf16.mxu0 %v1224
    %1850 = vmatpush1.bf16.msra.mxu0 %v1223
    %1851 = vmatprep.subr.bf16.mxu0 %v1216
    %1852 = vmatpush1.bf16.msra.mxu0 %v1215
    %1853 = vmatprep.subr.bf16.mxu0 %v1208
    %1854 = vmatpush1.bf16.msra.mxu0 %v1207
    %1855 = vmatprep.subr.bf16.mxu0 %v1200
    %1856 = vmatpush1.bf16.msra.mxu0 %v1199
    %1857 = vmatprep.subr.bf16.mxu0 %v1192
    %1858 = vmatpush1.bf16.msra.mxu0 %v1191
    %1859 = vmatprep.subr.bf16.mxu0 %v1184
    %1860 = vmatpush1.bf16.msra.mxu0 %v1183
    %1861 = vmatprep.subr.bf16.mxu0 %v1176
    %1862 = vmatpush1.bf16.msra.mxu0 %v1175
    %1863 = vmatprep.subr.bf16.mxu0 %v1296
    %1864 = vmatpush2.bf16.msra.mxu0 %v1295
    %1865 = vmatprep.subr.bf16.mxu0 %v1288
    %1866 = vmatpush2.bf16.msra.mxu0 %v1287
    %1867 = vmatprep.subr.bf16.mxu0 %v1280
    %1868 = vmatpush2.bf16.msra.mxu0 %v1279
    %1869 = vmatprep.subr.bf16.mxu0 %v1272
    %1870 = vmatpush2.bf16.msra.mxu0 %v1271
    %1871 = vmatprep.subr.bf16.mxu0 %v1264
    %1872 = vmatpush2.bf16.msra.mxu0 %v1263
    %1873 = vmatprep.subr.bf16.mxu0 %v1256
    %1874 = vmatpush2.bf16.msra.mxu0 %v1255
    %1875 = vmatprep.subr.bf16.mxu0 %v1248
    %1876 = vmatpush2.bf16.msra.mxu0 %v1247
    %1877 = vmatprep.subr.bf16.mxu0 %v1240
    %1878 = vmatpush2.bf16.msra.mxu0 %v1239
    %1879 = vmatprep.mubr.bf16.mxu0 %v396
    %1880 = vmatmul.mubr.bf16.gmra.mxu0 %v395
    %v1881 = vpop.f32.mrf.mxu0
    %v1882 = vadd.f32 %v368, %v1881
    %v1883 = vpop.f32.mrf.mxu0
    %v1884 = vadd.f32 %v372, %v1883
    %v1885 = vpop.f32.mrf.mxu0
    %v1886 = vpop.f32.mrf.mxu0
    %1887 = vdwg.mxu0
    %1888 = vmatprep.subr.bf16.mxu0 %v1360
    %1889 = vmatpush1.bf16.msra.mxu0 %v1359
    %1890 = vmatprep.subr.bf16.mxu0 %v1352
    %1891 = vmatpush1.bf16.msra.mxu0 %v1351
    %1892 = vmatprep.subr.bf16.mxu0 %v1344
    %1893 = vmatpush1.bf16.msra.mxu0 %v1343
    %1894 = vmatprep.subr.bf16.mxu0 %v1336
    %1895 = vmatpush1.bf16.msra.mxu0 %v1335
    %1896 = vmatprep.subr.bf16.mxu0 %v1328
    %1897 = vmatpush1.bf16.msra.mxu0 %v1327
    %1898 = vmatprep.subr.bf16.mxu0 %v1320
    %1899 = vmatpush1.bf16.msra.mxu0 %v1319
    %1900 = vmatprep.subr.bf16.mxu0 %v1312
    %1901 = vmatpush1.bf16.msra.mxu0 %v1311
    %1902 = vmatprep.subr.bf16.mxu0 %v1304
    %1903 = vmatpush1.bf16.msra.mxu0 %v1303
    %1904 = vmatprep.subr.bf16.mxu0 %v1424
    %1905 = vmatpush2.bf16.msra.mxu0 %v1423
    %1906 = vmatprep.subr.bf16.mxu0 %v1416
    %1907 = vmatpush2.bf16.msra.mxu0 %v1415
    %1908 = vmatprep.subr.bf16.mxu0 %v1408
    %1909 = vmatpush2.bf16.msra.mxu0 %v1407
    %1910 = vmatprep.subr.bf16.mxu0 %v1400
    %1911 = vmatpush2.bf16.msra.mxu0 %v1399
    %1912 = vmatprep.subr.bf16.mxu0 %v1392
    %1913 = vmatpush2.bf16.msra.mxu0 %v1391
    %1914 = vmatprep.subr.bf16.mxu0 %v1384
    %1915 = vmatpush2.bf16.msra.mxu0 %v1383
    %1916 = vmatprep.subr.bf16.mxu0 %v1376
    %1917 = vmatpush2.bf16.msra.mxu0 %v1375
    %1918 = vmatprep.subr.bf16.mxu0 %v1368
    %1919 = vmatpush2.bf16.msra.mxu0 %v1367
    %1920 = vmatprep.mubr.bf16.mxu0 %v398
    %1921 = vmatmul.mubr.bf16.gmra.mxu0 %v397
    %v1922 = vpop.f32.mrf.mxu0
    %v1923 = vadd.f32 %v1882, %v1922
    %v1924 = vpop.f32.mrf.mxu0
    %v1925 = vadd.f32 %v1884, %v1924
    %v1926 = vpop.f32.mrf.mxu0
    %v1927 = vpop.f32.mrf.mxu0
    %1928 = vdwg.mxu0
    %1929 = vmatprep.subr.bf16.mxu0 %v1234
    %1930 = vmatpush1.bf16.msra.mxu0 %v1233
    %1931 = vmatprep.subr.bf16.mxu0 %v1226
    %1932 = vmatpush1.bf16.msra.mxu0 %v1225
    %1933 = vmatprep.subr.bf16.mxu0 %v1218
    %1934 = vmatpush1.bf16.msra.mxu0 %v1217
    %1935 = vmatprep.subr.bf16.mxu0 %v1210
    %1936 = vmatpush1.bf16.msra.mxu0 %v1209
    %1937 = vmatprep.subr.bf16.mxu0 %v1202
    %1938 = vmatpush1.bf16.msra.mxu0 %v1201
    %1939 = vmatprep.subr.bf16.mxu0 %v1194
    %1940 = vmatpush1.bf16.msra.mxu0 %v1193
    %1941 = vmatprep.subr.bf16.mxu0 %v1186
    %1942 = vmatpush1.bf16.msra.mxu0 %v1185
    %1943 = vmatprep.subr.bf16.mxu0 %v1178
    %1944 = vmatpush1.bf16.msra.mxu0 %v1177
    %1945 = vmatprep.subr.bf16.mxu0 %v1298
    %1946 = vmatpush2.bf16.msra.mxu0 %v1297
    %1947 = vmatprep.subr.bf16.mxu0 %v1290
    %1948 = vmatpush2.bf16.msra.mxu0 %v1289
    %1949 = vmatprep.subr.bf16.mxu0 %v1282
    %1950 = vmatpush2.bf16.msra.mxu0 %v1281
    %1951 = vmatprep.subr.bf16.mxu0 %v1274
    %1952 = vmatpush2.bf16.msra.mxu0 %v1273
    %1953 = vmatprep.subr.bf16.mxu0 %v1266
    %1954 = vmatpush2.bf16.msra.mxu0 %v1265
    %1955 = vmatprep.subr.bf16.mxu0 %v1258
    %1956 = vmatpush2.bf16.msra.mxu0 %v1257
    %1957 = vmatprep.subr.bf16.mxu0 %v1250
    %1958 = vmatpush2.bf16.msra.mxu0 %v1249
    %1959 = vmatprep.subr.bf16.mxu0 %v1242
    %1960 = vmatpush2.bf16.msra.mxu0 %v1241
    %1961 = vmatprep.mubr.bf16.mxu0 %v396
    %1962 = vmatmul.mubr.bf16.gmra.mxu0 %v395
    %v1963 = vpop.f32.mrf.mxu0
    %v1964 = vadd.f32 %v376, %v1963
    %v1965 = vpop.f32.mrf.mxu0
    %v1966 = vadd.f32 %v380, %v1965
    %v1967 = vpop.f32.mrf.mxu0
    %v1968 = vpop.f32.mrf.mxu0
    %1969 = vdwg.mxu0
    %1970 = vmatprep.subr.bf16.mxu0 %v1362
    %1971 = vmatpush1.bf16.msra.mxu0 %v1361
    %1972 = vmatprep.subr.bf16.mxu0 %v1354
    %1973 = vmatpush1.bf16.msra.mxu0 %v1353
    %1974 = vmatprep.subr.bf16.mxu0 %v1346
    %1975 = vmatpush1.bf16.msra.mxu0 %v1345
    %1976 = vmatprep.subr.bf16.mxu0 %v1338
    %1977 = vmatpush1.bf16.msra.mxu0 %v1337
    %1978 = vmatprep.subr.bf16.mxu0 %v1330
    %1979 = vmatpush1.bf16.msra.mxu0 %v1329
    %1980 = vmatprep.subr.bf16.mxu0 %v1322
    %1981 = vmatpush1.bf16.msra.mxu0 %v1321
    %1982 = vmatprep.subr.bf16.mxu0 %v1314
    %1983 = vmatpush1.bf16.msra.mxu0 %v1313
    %1984 = vmatprep.subr.bf16.mxu0 %v1306
    %1985 = vmatpush1.bf16.msra.mxu0 %v1305
    %1986 = vmatprep.subr.bf16.mxu0 %v1426
    %1987 = vmatpush2.bf16.msra.mxu0 %v1425
    %1988 = vmatprep.subr.bf16.mxu0 %v1418
    %1989 = vmatpush2.bf16.msra.mxu0 %v1417
    %1990 = vmatprep.subr.bf16.mxu0 %v1410
    %1991 = vmatpush2.bf16.msra.mxu0 %v1409
    %1992 = vmatprep.subr.bf16.mxu0 %v1402
    %1993 = vmatpush2.bf16.msra.mxu0 %v1401
    %1994 = vmatprep.subr.bf16.mxu0 %v1394
    %1995 = vmatpush2.bf16.msra.mxu0 %v1393
    %1996 = vmatprep.subr.bf16.mxu0 %v1386
    %1997 = vmatpush2.bf16.msra.mxu0 %v1385
    %1998 = vmatprep.subr.bf16.mxu0 %v1378
    %1999 = vmatpush2.bf16.msra.mxu0 %v1377
    %2000 = vmatprep.subr.bf16.mxu0 %v1370
    %2001 = vmatpush2.bf16.msra.mxu0 %v1369
    %2002 = vmatprep.mubr.bf16.mxu0 %v398
    %2003 = vmatmul.mubr.bf16.gmra.mxu0 %v397
    %v2004 = vpop.f32.mrf.mxu0
    %v2005 = vadd.f32 %v1964, %v2004
    %v2006 = vpop.f32.mrf.mxu0
    %v2007 = vadd.f32 %v1966, %v2006
    %v2008 = vpop.f32.mrf.mxu0
    %v2009 = vpop.f32.mrf.mxu0
    %2010 = vdwg.mxu0
    %v2011 = vmax.f32 %v1759, 0.0
    %v2012 = vmax.f32 %v1761, 0.0
    %v2013 = vmax.f32 %v1841, 0.0
    %v2014 = vmax.f32 %v1843, 0.0
    %v2015 = vmax.f32 %v1923, 0.0
    %v2016 = vmax.f32 %v1925, 0.0
    %v2017 = vmax.f32 %v2005, 0.0
    %v2018 = vmax.f32 %v2007, 0.0
    %v2019 = vpack.c.bf16 %v2011, %v2011
    %v2020 = vpack.c.bf16 %v2012, %v2012
    %v2021 = vpack.c.bf16 %v2013, %v2013
    %v2022 = vpack.c.bf16 %v2014, %v2014
    %v2023 = vpack.c.bf16 %v2015, %v2015
    %v2024 = vpack.c.bf16 %v2016, %v2016
    %v2025 = vpack.c.bf16 %v2017, %v2017
    %v2026 = vpack.c.bf16 %v2018, %v2018
    %v2027 = vld [vmem:[#allocation8] sm:$0xf]
    %v2028 = vld [vmem:[#allocation8 + $0x4] sm:$0xf]
    %v2029 = vld [vmem:[#allocation8 + $0x8] sm:$0xf]
    %v2030 = vld [vmem:[#allocation8 + $0xc] sm:$0xf]
    %v2031 = vld [vmem:[#allocation8 + $0x10] sm:$0xf]
    %v2032 = vld [vmem:[#allocation8 + $0x14] sm:$0xf]
    %v2033 = vld [vmem:[#allocation8 + $0x18] sm:$0xf]
    %v2034 = vld [vmem:[#allocation8 + $0x1c] sm:$0xf]
    %v2035 = vld [vmem:[#allocation8 + $0x20] sm:$0xf]
    %v2036 = vld [vmem:[#allocation8 + $0x24] sm:$0xf]
    %v2037 = vld [vmem:[#allocation8 + $0x28] sm:$0xf]
    %v2038 = vld [vmem:[#allocation8 + $0x2c] sm:$0xf]
    %v2039 = vld [vmem:[#allocation8 + $0x30] sm:$0xf]
    %v2040 = vld [vmem:[#allocation8 + $0x34] sm:$0xf]
    %v2041 = vld [vmem:[#allocation8 + $0x38] sm:$0xf]
    %v2042 = vld [vmem:[#allocation8 + $0x3c] sm:$0xf]
    %v2043 = vld [vmem:[#allocation8 + $0x40] sm:$0xf]
    %v2044 = vld [vmem:[#allocation8 + $0x44] sm:$0xf]
    %v2045 = vld [vmem:[#allocation8 + $0x48] sm:$0xf]
    %v2046 = vld [vmem:[#allocation8 + $0x4c] sm:$0xf]
    %v2047 = vld [vmem:[#allocation8 + $0x50] sm:$0xf]
    %v2048 = vld [vmem:[#allocation8 + $0x54] sm:$0xf]
    %v2049 = vld [vmem:[#allocation8 + $0x58] sm:$0xf]
    %v2050 = vld [vmem:[#allocation8 + $0x5c] sm:$0xf]
    %v2051 = vld [vmem:[#allocation8 + $0x60] sm:$0xf]
    %v2052 = vld [vmem:[#allocation8 + $0x64] sm:$0xf]
    %v2053 = vld [vmem:[#allocation8 + $0x68] sm:$0xf]
    %v2054 = vld [vmem:[#allocation8 + $0x6c] sm:$0xf]
    %v2055 = vld [vmem:[#allocation8 + $0x70] sm:$0xf]
    %v2056 = vld [vmem:[#allocation8 + $0x74] sm:$0xf]
    %v2057 = vld [vmem:[#allocation8 + $0x78] sm:$0xf]
    %v2058 = vld [vmem:[#allocation8 + $0x7c] sm:$0xf]
    %v2059 = vld [vmem:[#allocation8 + $0x80] sm:$0xf]
    %v2060 = vld [vmem:[#allocation8 + $0x84] sm:$0xf]
    %v2061 = vld [vmem:[#allocation8 + $0x88] sm:$0xf]
    %v2062 = vld [vmem:[#allocation8 + $0x8c] sm:$0xf]
    %v2063 = vld [vmem:[#allocation8 + $0x90] sm:$0xf]
    %v2064 = vld [vmem:[#allocation8 + $0x94] sm:$0xf]
    %v2065 = vld [vmem:[#allocation8 + $0x98] sm:$0xf]
    %v2066 = vld [vmem:[#allocation8 + $0x9c] sm:$0xf]
    %v2067 = vld [vmem:[#allocation8 + $0xa0] sm:$0xf]
    %v2068 = vld [vmem:[#allocation8 + $0xa4] sm:$0xf]
    %v2069 = vld [vmem:[#allocation8 + $0xa8] sm:$0xf]
    %v2070 = vld [vmem:[#allocation8 + $0xac] sm:$0xf]
    %v2071 = vld [vmem:[#allocation8 + $0xb0] sm:$0xf]
    %v2072 = vld [vmem:[#allocation8 + $0xb4] sm:$0xf]
    %v2073 = vld [vmem:[#allocation8 + $0xb8] sm:$0xf]
    %v2074 = vld [vmem:[#allocation8 + $0xbc] sm:$0xf]
    %v2075 = vld [vmem:[#allocation8 + $0xc0] sm:$0xf]
    %v2076 = vld [vmem:[#allocation8 + $0xc4] sm:$0xf]
    %v2077 = vld [vmem:[#allocation8 + $0xc8] sm:$0xf]
    %v2078 = vld [vmem:[#allocation8 + $0xcc] sm:$0xf]
    %v2079 = vld [vmem:[#allocation8 + $0xd0] sm:$0xf]
    %v2080 = vld [vmem:[#allocation8 + $0xd4] sm:$0xf]
    %v2081 = vld [vmem:[#allocation8 + $0xd8] sm:$0xf]
    %v2082 = vld [vmem:[#allocation8 + $0xdc] sm:$0xf]
    %v2083 = vld [vmem:[#allocation8 + $0xe0] sm:$0xf]
    %v2084 = vld [vmem:[#allocation8 + $0xe4] sm:$0xf]
    %v2085 = vld [vmem:[#allocation8 + $0xe8] sm:$0xf]
    %v2086 = vld [vmem:[#allocation8 + $0xec] sm:$0xf]
    %v2087 = vld [vmem:[#allocation8 + $0xf0] sm:$0xf]
    %v2088 = vld [vmem:[#allocation8 + $0xf4] sm:$0xf]
    %v2089 = vld [vmem:[#allocation8 + $0xf8] sm:$0xf]
    %v2090 = vld [vmem:[#allocation8 + $0xfc] sm:$0xf]
    %v2091 = vld [vmem:[#allocation8 + $0x100] sm:$0xf]
    %v2092 = vld [vmem:[#allocation8 + $0x104] sm:$0xf]
    %v2093 = vld [vmem:[#allocation8 + $0x108] sm:$0xf]
    %v2094 = vld [vmem:[#allocation8 + $0x10c] sm:$0xf]
    %v2095 = vld [vmem:[#allocation8 + $0x110] sm:$0xf]
    %v2096 = vld [vmem:[#allocation8 + $0x114] sm:$0xf]
    %v2097 = vld [vmem:[#allocation8 + $0x118] sm:$0xf]
    %v2098 = vld [vmem:[#allocation8 + $0x11c] sm:$0xf]
    %v2099 = vld [vmem:[#allocation8 + $0x120] sm:$0xf]
    %v2100 = vld [vmem:[#allocation8 + $0x124] sm:$0xf]
    %v2101 = vld [vmem:[#allocation8 + $0x128] sm:$0xf]
    %v2102 = vld [vmem:[#allocation8 + $0x12c] sm:$0xf]
    %v2103 = vld [vmem:[#allocation8 + $0x130] sm:$0xf]
    %v2104 = vld [vmem:[#allocation8 + $0x134] sm:$0xf]
    %v2105 = vld [vmem:[#allocation8 + $0x138] sm:$0xf]
    %v2106 = vld [vmem:[#allocation8 + $0x13c] sm:$0xf]
    %v2107 = vld [vmem:[#allocation8 + $0x140] sm:$0xf]
    %v2108 = vld [vmem:[#allocation8 + $0x144] sm:$0xf]
    %v2109 = vld [vmem:[#allocation8 + $0x148] sm:$0xf]
    %v2110 = vld [vmem:[#allocation8 + $0x14c] sm:$0xf]
    %v2111 = vld [vmem:[#allocation8 + $0x150] sm:$0xf]
    %v2112 = vld [vmem:[#allocation8 + $0x154] sm:$0xf]
    %v2113 = vld [vmem:[#allocation8 + $0x158] sm:$0xf]
    %v2114 = vld [vmem:[#allocation8 + $0x15c] sm:$0xf]
    %v2115 = vld [vmem:[#allocation8 + $0x160] sm:$0xf]
    %v2116 = vld [vmem:[#allocation8 + $0x164] sm:$0xf]
    %v2117 = vld [vmem:[#allocation8 + $0x168] sm:$0xf]
    %v2118 = vld [vmem:[#allocation8 + $0x16c] sm:$0xf]
    %v2119 = vld [vmem:[#allocation8 + $0x170] sm:$0xf]
    %v2120 = vld [vmem:[#allocation8 + $0x174] sm:$0xf]
    %v2121 = vld [vmem:[#allocation8 + $0x178] sm:$0xf]
    %v2122 = vld [vmem:[#allocation8 + $0x17c] sm:$0xf]
    %v2123 = vld [vmem:[#allocation8 + $0x180] sm:$0xf]
    %v2124 = vld [vmem:[#allocation8 + $0x184] sm:$0xf]
    %v2125 = vld [vmem:[#allocation8 + $0x188] sm:$0xf]
    %v2126 = vld [vmem:[#allocation8 + $0x18c] sm:$0xf]
    %v2127 = vld [vmem:[#allocation8 + $0x190] sm:$0xf]
    %v2128 = vld [vmem:[#allocation8 + $0x194] sm:$0xf]
    %v2129 = vld [vmem:[#allocation8 + $0x198] sm:$0xf]
    %v2130 = vld [vmem:[#allocation8 + $0x19c] sm:$0xf]
    %v2131 = vld [vmem:[#allocation8 + $0x1a0] sm:$0xf]
    %v2132 = vld [vmem:[#allocation8 + $0x1a4] sm:$0xf]
    %v2133 = vld [vmem:[#allocation8 + $0x1a8] sm:$0xf]
    %v2134 = vld [vmem:[#allocation8 + $0x1ac] sm:$0xf]
    %v2135 = vld [vmem:[#allocation8 + $0x1b0] sm:$0xf]
    %v2136 = vld [vmem:[#allocation8 + $0x1b4] sm:$0xf]
    %v2137 = vld [vmem:[#allocation8 + $0x1b8] sm:$0xf]
    %v2138 = vld [vmem:[#allocation8 + $0x1bc] sm:$0xf]
    %v2139 = vld [vmem:[#allocation8 + $0x1c0] sm:$0xf]
    %v2140 = vld [vmem:[#allocation8 + $0x1c4] sm:$0xf]
    %v2141 = vld [vmem:[#allocation8 + $0x1c8] sm:$0xf]
    %v2142 = vld [vmem:[#allocation8 + $0x1cc] sm:$0xf]
    %v2143 = vld [vmem:[#allocation8 + $0x1d0] sm:$0xf]
    %v2144 = vld [vmem:[#allocation8 + $0x1d4] sm:$0xf]
    %v2145 = vld [vmem:[#allocation8 + $0x1d8] sm:$0xf]
    %v2146 = vld [vmem:[#allocation8 + $0x1dc] sm:$0xf]
    %v2147 = vld [vmem:[#allocation8 + $0x1e0] sm:$0xf]
    %v2148 = vld [vmem:[#allocation8 + $0x1e4] sm:$0xf]
    %v2149 = vld [vmem:[#allocation8 + $0x1e8] sm:$0xf]
    %v2150 = vld [vmem:[#allocation8 + $0x1ec] sm:$0xf]
    %v2151 = vld [vmem:[#allocation8 + $0x1f0] sm:$0xf]
    %v2152 = vld [vmem:[#allocation8 + $0x1f4] sm:$0xf]
    %v2153 = vld [vmem:[#allocation8 + $0x1f8] sm:$0xf]
    %v2154 = vld [vmem:[#allocation8 + $0x1fc] sm:$0xf]
    %v2155 = vld [vmem:[%s4] sm:$0x1]
    %v2157 = vlaneseq
    %v2158 = vshrl.u32 %v2157, 7
    %v2159 = vsub.s32 0, %v2158
    %v2160 = vrot.slane %v2155, %v2159
    %v2290 = vunpack.c.l.b16 %v2027
    %v2291 = vunpack.c.l.b16 %v2028
    %v2292 = vunpack.c.l.b16 %v2029
    %v2293 = vunpack.c.l.b16 %v2030
    %v2294 = vunpack.c.l.b16 %v2031
    %v2295 = vunpack.c.l.b16 %v2032
    %v2296 = vunpack.c.l.b16 %v2033
    %v2297 = vunpack.c.l.b16 %v2034
    %v2298 = vunpack.c.l.b16 %v2035
    %v2299 = vunpack.c.l.b16 %v2036
    %v2300 = vunpack.c.l.b16 %v2037
    %v2301 = vunpack.c.l.b16 %v2038
    %v2302 = vunpack.c.l.b16 %v2039
    %v2303 = vunpack.c.l.b16 %v2040
    %v2304 = vunpack.c.l.b16 %v2041
    %v2305 = vunpack.c.l.b16 %v2042
    %v2306 = vunpack.c.l.b16 %v2043
    %v2307 = vunpack.c.l.b16 %v2044
    %v2308 = vunpack.c.l.b16 %v2045
    %v2309 = vunpack.c.l.b16 %v2046
    %v2310 = vunpack.c.l.b16 %v2047
    %v2311 = vunpack.c.l.b16 %v2048
    %v2312 = vunpack.c.l.b16 %v2049
    %v2313 = vunpack.c.l.b16 %v2050
    %v2314 = vunpack.c.l.b16 %v2051
    %v2315 = vunpack.c.l.b16 %v2052
    %v2316 = vunpack.c.l.b16 %v2053
    %v2317 = vunpack.c.l.b16 %v2054
    %v2318 = vunpack.c.l.b16 %v2055
    %v2319 = vunpack.c.l.b16 %v2056
    %v2320 = vunpack.c.l.b16 %v2057
    %v2321 = vunpack.c.l.b16 %v2058
    %v2322 = vunpack.c.l.b16 %v2059
    %v2323 = vunpack.c.l.b16 %v2060
    %v2324 = vunpack.c.l.b16 %v2061
    %v2325 = vunpack.c.l.b16 %v2062
    %v2326 = vunpack.c.l.b16 %v2063
    %v2327 = vunpack.c.l.b16 %v2064
    %v2328 = vunpack.c.l.b16 %v2065
    %v2329 = vunpack.c.l.b16 %v2066
    %v2330 = vunpack.c.l.b16 %v2067
    %v2331 = vunpack.c.l.b16 %v2068
    %v2332 = vunpack.c.l.b16 %v2069
    %v2333 = vunpack.c.l.b16 %v2070
    %v2334 = vunpack.c.l.b16 %v2071
    %v2335 = vunpack.c.l.b16 %v2072
    %v2336 = vunpack.c.l.b16 %v2073
    %v2337 = vunpack.c.l.b16 %v2074
    %v2338 = vunpack.c.l.b16 %v2075
    %v2339 = vunpack.c.l.b16 %v2076
    %v2340 = vunpack.c.l.b16 %v2077
    %v2341 = vunpack.c.l.b16 %v2078
    %v2342 = vunpack.c.l.b16 %v2079
    %v2343 = vunpack.c.l.b16 %v2080
    %v2344 = vunpack.c.l.b16 %v2081
    %v2345 = vunpack.c.l.b16 %v2082
    %v2346 = vunpack.c.l.b16 %v2083
    %v2347 = vunpack.c.l.b16 %v2084
    %v2348 = vunpack.c.l.b16 %v2085
    %v2349 = vunpack.c.l.b16 %v2086
    %v2350 = vunpack.c.l.b16 %v2087
    %v2351 = vunpack.c.l.b16 %v2088
    %v2352 = vunpack.c.l.b16 %v2089
    %v2353 = vunpack.c.l.b16 %v2090
    %v2354 = vunpack.c.l.b16 %v2091
    %v2355 = vunpack.c.l.b16 %v2092
    %v2356 = vunpack.c.l.b16 %v2093
    %v2357 = vunpack.c.l.b16 %v2094
    %v2358 = vunpack.c.l.b16 %v2095
    %v2359 = vunpack.c.l.b16 %v2096
    %v2360 = vunpack.c.l.b16 %v2097
    %v2361 = vunpack.c.l.b16 %v2098
    %v2362 = vunpack.c.l.b16 %v2099
    %v2363 = vunpack.c.l.b16 %v2100
    %v2364 = vunpack.c.l.b16 %v2101
    %v2365 = vunpack.c.l.b16 %v2102
    %v2366 = vunpack.c.l.b16 %v2103
    %v2367 = vunpack.c.l.b16 %v2104
    %v2368 = vunpack.c.l.b16 %v2105
    %v2369 = vunpack.c.l.b16 %v2106
    %v2370 = vunpack.c.l.b16 %v2107
    %v2371 = vunpack.c.l.b16 %v2108
    %v2372 = vunpack.c.l.b16 %v2109
    %v2373 = vunpack.c.l.b16 %v2110
    %v2374 = vunpack.c.l.b16 %v2111
    %v2375 = vunpack.c.l.b16 %v2112
    %v2376 = vunpack.c.l.b16 %v2113
    %v2377 = vunpack.c.l.b16 %v2114
    %v2378 = vunpack.c.l.b16 %v2115
    %v2379 = vunpack.c.l.b16 %v2116
    %v2380 = vunpack.c.l.b16 %v2117
    %v2381 = vunpack.c.l.b16 %v2118
    %v2382 = vunpack.c.l.b16 %v2119
    %v2383 = vunpack.c.l.b16 %v2120
    %v2384 = vunpack.c.l.b16 %v2121
    %v2385 = vunpack.c.l.b16 %v2122
    %v2386 = vunpack.c.l.b16 %v2123
    %v2387 = vunpack.c.l.b16 %v2124
    %v2388 = vunpack.c.l.b16 %v2125
    %v2389 = vunpack.c.l.b16 %v2126
    %v2390 = vunpack.c.l.b16 %v2127
    %v2391 = vunpack.c.l.b16 %v2128
    %v2392 = vunpack.c.l.b16 %v2129
    %v2393 = vunpack.c.l.b16 %v2130
    %v2394 = vunpack.c.l.b16 %v2131
    %v2395 = vunpack.c.l.b16 %v2132
    %v2396 = vunpack.c.l.b16 %v2133
    %v2397 = vunpack.c.l.b16 %v2134
    %v2398 = vunpack.c.l.b16 %v2135
    %v2399 = vunpack.c.l.b16 %v2136
    %v2400 = vunpack.c.l.b16 %v2137
    %v2401 = vunpack.c.l.b16 %v2138
    %v2402 = vunpack.c.l.b16 %v2139
    %v2403 = vunpack.c.l.b16 %v2140
    %v2404 = vunpack.c.l.b16 %v2141
    %v2405 = vunpack.c.l.b16 %v2142
    %v2406 = vunpack.c.l.b16 %v2143
    %v2407 = vunpack.c.l.b16 %v2144
    %v2408 = vunpack.c.l.b16 %v2145
    %v2409 = vunpack.c.l.b16 %v2146
    %v2410 = vunpack.c.l.b16 %v2147
    %v2411 = vunpack.c.l.b16 %v2148
    %v2412 = vunpack.c.l.b16 %v2149
    %v2413 = vunpack.c.l.b16 %v2150
    %v2414 = vunpack.c.l.b16 %v2151
    %v2415 = vunpack.c.l.b16 %v2152
    %v2416 = vunpack.c.l.b16 %v2153
    %v2417 = vunpack.c.l.b16 %v2154
    %v2418 = vpack.c.b16 %v2291, %v2290
    %v2419 = vpack.c.b16 %v2293, %v2292
    %v2420 = vpack.c.b16 %v2295, %v2294
    %v2421 = vpack.c.b16 %v2297, %v2296
    %v2422 = vpack.c.b16 %v2299, %v2298
    %v2423 = vpack.c.b16 %v2301, %v2300
    %v2424 = vpack.c.b16 %v2303, %v2302
    %v2425 = vpack.c.b16 %v2305, %v2304
    %v2426 = vpack.c.b16 %v2307, %v2306
    %v2427 = vpack.c.b16 %v2309, %v2308
    %v2428 = vpack.c.b16 %v2311, %v2310
    %v2429 = vpack.c.b16 %v2313, %v2312
    %v2430 = vpack.c.b16 %v2315, %v2314
    %v2431 = vpack.c.b16 %v2317, %v2316
    %v2432 = vpack.c.b16 %v2319, %v2318
    %v2433 = vpack.c.b16 %v2321, %v2320
    %v2434 = vpack.c.b16 %v2323, %v2322
    %v2435 = vpack.c.b16 %v2325, %v2324
    %v2436 = vpack.c.b16 %v2327, %v2326
    %v2437 = vpack.c.b16 %v2329, %v2328
    %v2438 = vpack.c.b16 %v2331, %v2330
    %v2439 = vpack.c.b16 %v2333, %v2332
    %v2440 = vpack.c.b16 %v2335, %v2334
    %v2441 = vpack.c.b16 %v2337, %v2336
    %v2442 = vpack.c.b16 %v2339, %v2338
    %v2443 = vpack.c.b16 %v2341, %v2340
    %v2444 = vpack.c.b16 %v2343, %v2342
    %v2445 = vpack.c.b16 %v2345, %v2344
    %v2446 = vpack.c.b16 %v2347, %v2346
    %v2447 = vpack.c.b16 %v2349, %v2348
    %v2448 = vpack.c.b16 %v2351, %v2350
    %v2449 = vpack.c.b16 %v2353, %v2352
    %v2450 = vpack.c.b16 %v2355, %v2354
    %v2451 = vpack.c.b16 %v2357, %v2356
    %v2452 = vpack.c.b16 %v2359, %v2358
    %v2453 = vpack.c.b16 %v2361, %v2360
    %v2454 = vpack.c.b16 %v2363, %v2362
    %v2455 = vpack.c.b16 %v2365, %v2364
    %v2456 = vpack.c.b16 %v2367, %v2366
    %v2457 = vpack.c.b16 %v2369, %v2368
    %v2458 = vpack.c.b16 %v2371, %v2370
    %v2459 = vpack.c.b16 %v2373, %v2372
    %v2460 = vpack.c.b16 %v2375, %v2374
    %v2461 = vpack.c.b16 %v2377, %v2376
    %v2462 = vpack.c.b16 %v2379, %v2378
    %v2463 = vpack.c.b16 %v2381, %v2380
    %v2464 = vpack.c.b16 %v2383, %v2382
    %v2465 = vpack.c.b16 %v2385, %v2384
    %v2466 = vpack.c.b16 %v2387, %v2386
    %v2467 = vpack.c.b16 %v2389, %v2388
    %v2468 = vpack.c.b16 %v2391, %v2390
    %v2469 = vpack.c.b16 %v2393, %v2392
    %v2470 = vpack.c.b16 %v2395, %v2394
    %v2471 = vpack.c.b16 %v2397, %v2396
    %v2472 = vpack.c.b16 %v2399, %v2398
    %v2473 = vpack.c.b16 %v2401, %v2400
    %v2474 = vpack.c.b16 %v2403, %v2402
    %v2475 = vpack.c.b16 %v2405, %v2404
    %v2476 = vpack.c.b16 %v2407, %v2406
    %v2477 = vpack.c.b16 %v2409, %v2408
    %v2478 = vpack.c.b16 %v2411, %v2410
    %v2479 = vpack.c.b16 %v2413, %v2412
    %v2480 = vpack.c.b16 %v2415, %v2414
    %v2481 = vpack.c.b16 %v2417, %v2416
    %2546 = vmatprep.subr.bf16.mxu0 0
    %2547 = vmatpush1.bf16.msra.mxu0 %v2425
    %2548 = vmatprep.subr.bf16.mxu0 0
    %2549 = vmatpush1.bf16.msra.mxu0 %v2424
    %2550 = vmatprep.subr.bf16.mxu0 0
    %2551 = vmatpush1.bf16.msra.mxu0 %v2423
    %2552 = vmatprep.subr.bf16.mxu0 0
    %2553 = vmatpush1.bf16.msra.mxu0 %v2422
    %2554 = vmatprep.subr.bf16.mxu0 0
    %2555 = vmatpush1.bf16.msra.mxu0 %v2421
    %2556 = vmatprep.subr.bf16.mxu0 0
    %2557 = vmatpush1.bf16.msra.mxu0 %v2420
    %2558 = vmatprep.subr.bf16.mxu0 0
    %2559 = vmatpush1.bf16.msra.mxu0 %v2419
    %2560 = vmatprep.subr.bf16.mxu0 0
    %2561 = vmatpush1.bf16.msra.mxu0 %v2418
    %2562 = vmatprep.subr.bf16.mxu0 0
    %2563 = vmatpush2.bf16.msra.mxu0 %v2433
    %2564 = vmatprep.subr.bf16.mxu0 0
    %2565 = vmatpush2.bf16.msra.mxu0 %v2432
    %2566 = vmatprep.subr.bf16.mxu0 0
    %2567 = vmatpush2.bf16.msra.mxu0 %v2431
    %2568 = vmatprep.subr.bf16.mxu0 0
    %2569 = vmatpush2.bf16.msra.mxu0 %v2430
    %2570 = vmatprep.subr.bf16.mxu0 0
    %2571 = vmatpush2.bf16.msra.mxu0 %v2429
    %2572 = vmatprep.subr.bf16.mxu0 0
    %2573 = vmatpush2.bf16.msra.mxu0 %v2428
    %2574 = vmatprep.subr.bf16.mxu0 0
    %2575 = vmatpush2.bf16.msra.mxu0 %v2427
    %2576 = vmatprep.subr.bf16.mxu0 0
    %2577 = vmatpush2.bf16.msra.mxu0 %v2426
    %2578 = vmatprep.mubr.bf16.mxu0 %v2020
    %2579 = vmatmul.mubr.bf16.gmra.mxu0 %v2019
    %v2580 = vpop.f32.mrf.mxu0
    %v2581 = vadd.f32 %v2160, %v2580
    %v2582 = vpop.f32.mrf.mxu0
    %v2583 = vpop.f32.mrf.mxu0
    %v2584 = vpop.f32.mrf.mxu0
    %2585 = vdwg.mxu0
    %2586 = vmatprep.subr.bf16.mxu0 0
    %2587 = vmatpush1.bf16.msra.mxu0 %v2441
    %2588 = vmatprep.subr.bf16.mxu0 0
    %2589 = vmatpush1.bf16.msra.mxu0 %v2440
    %2590 = vmatprep.subr.bf16.mxu0 0
    %2591 = vmatpush1.bf16.msra.mxu0 %v2439
    %2592 = vmatprep.subr.bf16.mxu0 0
    %2593 = vmatpush1.bf16.msra.mxu0 %v2438
    %2594 = vmatprep.subr.bf16.mxu0 0
    %2595 = vmatpush1.bf16.msra.mxu0 %v2437
    %2596 = vmatprep.subr.bf16.mxu0 0
    %2597 = vmatpush1.bf16.msra.mxu0 %v2436
    %2598 = vmatprep.subr.bf16.mxu0 0
    %2599 = vmatpush1.bf16.msra.mxu0 %v2435
    %2600 = vmatprep.subr.bf16.mxu0 0
    %2601 = vmatpush1.bf16.msra.mxu0 %v2434
    %2602 = vmatprep.subr.bf16.mxu0 0
    %2603 = vmatpush2.bf16.msra.mxu0 %v2449
    %2604 = vmatprep.subr.bf16.mxu0 0
    %2605 = vmatpush2.bf16.msra.mxu0 %v2448
    %2606 = vmatprep.subr.bf16.mxu0 0
    %2607 = vmatpush2.bf16.msra.mxu0 %v2447
    %2608 = vmatprep.subr.bf16.mxu0 0
    %2609 = vmatpush2.bf16.msra.mxu0 %v2446
    %2610 = vmatprep.subr.bf16.mxu0 0
    %2611 = vmatpush2.bf16.msra.mxu0 %v2445
    %2612 = vmatprep.subr.bf16.mxu0 0
    %2613 = vmatpush2.bf16.msra.mxu0 %v2444
    %2614 = vmatprep.subr.bf16.mxu0 0
    %2615 = vmatpush2.bf16.msra.mxu0 %v2443
    %2616 = vmatprep.subr.bf16.mxu0 0
    %2617 = vmatpush2.bf16.msra.mxu0 %v2442
    %2618 = vmatprep.mubr.bf16.mxu0 %v2022
    %2619 = vmatmul.mubr.bf16.gmra.mxu0 %v2021
    %v2620 = vpop.f32.mrf.mxu0
    %v2621 = vadd.f32 %v2581, %v2620
    %v2622 = vpop.f32.mrf.mxu0
    %v2623 = vpop.f32.mrf.mxu0
    %v2624 = vpop.f32.mrf.mxu0
    %2625 = vdwg.mxu0
    %2626 = vmatprep.subr.bf16.mxu0 0
    %2627 = vmatpush1.bf16.msra.mxu0 %v2457
    %2628 = vmatprep.subr.bf16.mxu0 0
    %2629 = vmatpush1.bf16.msra.mxu0 %v2456
    %2630 = vmatprep.subr.bf16.mxu0 0
    %2631 = vmatpush1.bf16.msra.mxu0 %v2455
    %2632 = vmatprep.subr.bf16.mxu0 0
    %2633 = vmatpush1.bf16.msra.mxu0 %v2454
    %2634 = vmatprep.subr.bf16.mxu0 0
    %2635 = vmatpush1.bf16.msra.mxu0 %v2453
    %2636 = vmatprep.subr.bf16.mxu0 0
    %2637 = vmatpush1.bf16.msra.mxu0 %v2452
    %2638 = vmatprep.subr.bf16.mxu0 0
    %2639 = vmatpush1.bf16.msra.mxu0 %v2451
    %2640 = vmatprep.subr.bf16.mxu0 0
    %2641 = vmatpush1.bf16.msra.mxu0 %v2450
    %2642 = vmatprep.subr.bf16.mxu0 0
    %2643 = vmatpush2.bf16.msra.mxu0 %v2465
    %2644 = vmatprep.subr.bf16.mxu0 0
    %2645 = vmatpush2.bf16.msra.mxu0 %v2464
    %2646 = vmatprep.subr.bf16.mxu0 0
    %2647 = vmatpush2.bf16.msra.mxu0 %v2463
    %2648 = vmatprep.subr.bf16.mxu0 0
    %2649 = vmatpush2.bf16.msra.mxu0 %v2462
    %2650 = vmatprep.subr.bf16.mxu0 0
    %2651 = vmatpush2.bf16.msra.mxu0 %v2461
    %2652 = vmatprep.subr.bf16.mxu0 0
    %2653 = vmatpush2.bf16.msra.mxu0 %v2460
    %2654 = vmatprep.subr.bf16.mxu0 0
    %2655 = vmatpush2.bf16.msra.mxu0 %v2459
    %2656 = vmatprep.subr.bf16.mxu0 0
    %2657 = vmatpush2.bf16.msra.mxu0 %v2458
    %2658 = vmatprep.mubr.bf16.mxu0 %v2024
    %2659 = vmatmul.mubr.bf16.gmra.mxu0 %v2023
    %v2660 = vpop.f32.mrf.mxu0
    %v2661 = vadd.f32 %v2621, %v2660
    %v2662 = vpop.f32.mrf.mxu0
    %v2663 = vpop.f32.mrf.mxu0
    %v2664 = vpop.f32.mrf.mxu0
    %2665 = vdwg.mxu0
    %2666 = vmatprep.subr.bf16.mxu0 0
    %2667 = vmatpush1.bf16.msra.mxu0 %v2473
    %2668 = vmatprep.subr.bf16.mxu0 0
    %2669 = vmatpush1.bf16.msra.mxu0 %v2472
    %2670 = vmatprep.subr.bf16.mxu0 0
    %2671 = vmatpush1.bf16.msra.mxu0 %v2471
    %2672 = vmatprep.subr.bf16.mxu0 0
    %2673 = vmatpush1.bf16.msra.mxu0 %v2470
    %2674 = vmatprep.subr.bf16.mxu0 0
    %2675 = vmatpush1.bf16.msra.mxu0 %v2469
    %2676 = vmatprep.subr.bf16.mxu0 0
    %2677 = vmatpush1.bf16.msra.mxu0 %v2468
    %2678 = vmatprep.subr.bf16.mxu0 0
    %2679 = vmatpush1.bf16.msra.mxu0 %v2467
    %2680 = vmatprep.subr.bf16.mxu0 0
    %2681 = vmatpush1.bf16.msra.mxu0 %v2466
    %2682 = vmatprep.subr.bf16.mxu0 0
    %2683 = vmatpush2.bf16.msra.mxu0 %v2481
    %2684 = vmatprep.subr.bf16.mxu0 0
    %2685 = vmatpush2.bf16.msra.mxu0 %v2480
    %2686 = vmatprep.subr.bf16.mxu0 0
    %2687 = vmatpush2.bf16.msra.mxu0 %v2479
    %2688 = vmatprep.subr.bf16.mxu0 0
    %2689 = vmatpush2.bf16.msra.mxu0 %v2478
    %2690 = vmatprep.subr.bf16.mxu0 0
    %2691 = vmatpush2.bf16.msra.mxu0 %v2477
    %2692 = vmatprep.subr.bf16.mxu0 0
    %2693 = vmatpush2.bf16.msra.mxu0 %v2476
    %2694 = vmatprep.subr.bf16.mxu0 0
    %2695 = vmatpush2.bf16.msra.mxu0 %v2475
    %2696 = vmatprep.subr.bf16.mxu0 0
    %2697 = vmatpush2.bf16.msra.mxu0 %v2474
    %2698 = vmatprep.mubr.bf16.mxu0 %v2026
    %2699 = vmatmul.mubr.bf16.gmra.mxu0 %v2025
    %v2700 = vpop.f32.mrf.mxu0
    %v2701 = vadd.f32 %v2661, %v2700
    %v2702 = vpop.f32.mrf.mxu0
    %v2703 = vpop.f32.mrf.mxu0
    %v2704 = vpop.f32.mrf.mxu0
    %2705 = vdwg.mxu0
    %2706 = vmax.xlane.f32.xlu0 %v2701
    %v2707 = vpop.xlane.xlu0 %2706
    %v2708 = vsub.f32 %v2701, %v2707
    %v2709 = vmul.f32 %v2708, 1.442695
    %v2710 = vpow.pop %v2709
    %v2711 = vpack.c.bf16 %v2710, %v2710
    %v2712 = vunpack.c.l.bf16 %v2711
    %v2713 = vsub.f32 %v2710, %v2712
    %v2714 = vpack.c.bf16 %v2713, %v2713
    %v2715 = vld [vmem:[#allocation10] sm:$0xf]
    %v2716 = vld [vmem:[#allocation10 + $0x4] sm:$0xf]
    %v2717 = vld [vmem:[#allocation10 + $0x8] sm:$0xf]
    %v2718 = vld [vmem:[#allocation10 + $0xc] sm:$0xf]
    %v2719 = vld [vmem:[#allocation10 + $0x10] sm:$0xf]
    %v2720 = vld [vmem:[#allocation10 + $0x14] sm:$0xf]
    %v2721 = vld [vmem:[#allocation10 + $0x18] sm:$0xf]
    %v2722 = vld [vmem:[#allocation10 + $0x1c] sm:$0xf]
    %v2723 = vld [vmem:[#allocation10 + $0x20] sm:$0xf]
    %v2724 = vld [vmem:[#allocation10 + $0x24] sm:$0xf]
    %v2725 = vld [vmem:[#allocation10 + $0x28] sm:$0xf]
    %v2726 = vld [vmem:[#allocation10 + $0x2c] sm:$0xf]
    %v2727 = vld [vmem:[#allocation10 + $0x30] sm:$0xf]
    %v2728 = vld [vmem:[#allocation10 + $0x34] sm:$0xf]
    %v2729 = vld [vmem:[#allocation10 + $0x38] sm:$0xf]
    %v2730 = vld [vmem:[#allocation10 + $0x3c] sm:$0xf]
    %v2747 = vunpack.c.l.b16 %v2715
    %v2748 = vunpack.c.l.b16 %v2716
    %v2749 = vunpack.c.l.b16 %v2717
    %v2750 = vunpack.c.l.b16 %v2718
    %v2751 = vunpack.c.l.b16 %v2719
    %v2752 = vunpack.c.l.b16 %v2720
    %v2753 = vunpack.c.l.b16 %v2721
    %v2754 = vunpack.c.l.b16 %v2722
    %v2755 = vunpack.c.l.b16 %v2723
    %v2756 = vunpack.c.l.b16 %v2724
    %v2757 = vunpack.c.l.b16 %v2725
    %v2758 = vunpack.c.l.b16 %v2726
    %v2759 = vunpack.c.l.b16 %v2727
    %v2760 = vunpack.c.l.b16 %v2728
    %v2761 = vunpack.c.l.b16 %v2729
    %v2762 = vunpack.c.l.b16 %v2730
    %v2763 = vpack.c.b16 %v2748, %v2747
    %v2764 = vpack.c.b16 %v2750, %v2749
    %v2765 = vpack.c.b16 %v2752, %v2751
    %v2766 = vpack.c.b16 %v2754, %v2753
    %v2767 = vpack.c.b16 %v2756, %v2755
    %v2768 = vpack.c.b16 %v2758, %v2757
    %v2769 = vpack.c.b16 %v2760, %v2759
    %v2770 = vpack.c.b16 %v2762, %v2761
    %2779 = vmatprep.subr.bf16.mxu0 0
    %2780 = vmatpush1.bf16.msra.mxu0 %v2770
    %2781 = vmatprep.subr.bf16.mxu0 0
    %2782 = vmatpush1.bf16.msra.mxu0 %v2769
    %2783 = vmatprep.subr.bf16.mxu0 0
    %2784 = vmatpush1.bf16.msra.mxu0 %v2768
    %2785 = vmatprep.subr.bf16.mxu0 0
    %2786 = vmatpush1.bf16.msra.mxu0 %v2767
    %2787 = vmatprep.subr.bf16.mxu0 0
    %2788 = vmatpush1.bf16.msra.mxu0 %v2766
    %2789 = vmatprep.subr.bf16.mxu0 0
    %2790 = vmatpush1.bf16.msra.mxu0 %v2765
    %2791 = vmatprep.subr.bf16.mxu0 0
    %2792 = vmatpush1.bf16.msra.mxu0 %v2764
    %2793 = vmatprep.subr.bf16.mxu0 0
    %2794 = vmatpush1.bf16.msra.mxu0 %v2763
    %2795 = vmatprep.subr.bf16.mxu0 0
    %2796 = vmatpush2.bf16.msra.mxu0 0
    %2797 = vmatprep.subr.bf16.mxu0 0
    %2798 = vmatpush2.bf16.msra.mxu0 0
    %2799 = vmatprep.subr.bf16.mxu0 0
    %2800 = vmatpush2.bf16.msra.mxu0 0
    %2801 = vmatprep.subr.bf16.mxu0 0
    %2802 = vmatpush2.bf16.msra.mxu0 0
    %2803 = vmatprep.subr.bf16.mxu0 0
    %2804 = vmatpush2.bf16.msra.mxu0 0
    %2805 = vmatprep.subr.bf16.mxu0 0
    %2806 = vmatpush2.bf16.msra.mxu0 0
    %2807 = vmatprep.subr.bf16.mxu0 0
    %2808 = vmatpush2.bf16.msra.mxu0 0
    %2809 = vmatprep.subr.bf16.mxu0 0
    %2810 = vmatpush2.bf16.msra.mxu0 0
    %2811 = vmatprep.mubr.bf16.mxu0 0
    %2812 = vmatmul.mubr.bf16.gmra.mxu0 %v2714
    %v2813 = vpop.f32.mrf.mxu0
    %v2814 = vadd.f32 0.0, %v2813
    %v2815 = vpop.f32.mrf.mxu0
    %v2816 = vpop.f32.mrf.mxu0
    %v2817 = vpop.f32.mrf.mxu0
    %2818 = vdwg.mxu0
    %2819 = vmatprep.subr.bf16.mxu0 0
    %2820 = vmatpush1.bf16.msra.mxu0 %v2770
    %2821 = vmatprep.subr.bf16.mxu0 0
    %2822 = vmatpush1.bf16.msra.mxu0 %v2769
    %2823 = vmatprep.subr.bf16.mxu0 0
    %2824 = vmatpush1.bf16.msra.mxu0 %v2768
    %2825 = vmatprep.subr.bf16.mxu0 0
    %2826 = vmatpush1.bf16.msra.mxu0 %v2767
    %2827 = vmatprep.subr.bf16.mxu0 0
    %2828 = vmatpush1.bf16.msra.mxu0 %v2766
    %2829 = vmatprep.subr.bf16.mxu0 0
    %2830 = vmatpush1.bf16.msra.mxu0 %v2765
    %2831 = vmatprep.subr.bf16.mxu0 0
    %2832 = vmatpush1.bf16.msra.mxu0 %v2764
    %2833 = vmatprep.subr.bf16.mxu0 0
    %2834 = vmatpush1.bf16.msra.mxu0 %v2763
    %2835 = vmatprep.subr.bf16.mxu0 0
    %2836 = vmatpush2.bf16.msra.mxu0 0
    %2837 = vmatprep.subr.bf16.mxu0 0
    %2838 = vmatpush2.bf16.msra.mxu0 0
    %2839 = vmatprep.subr.bf16.mxu0 0
    %2840 = vmatpush2.bf16.msra.mxu0 0
    %2841 = vmatprep.subr.bf16.mxu0 0
    %2842 = vmatpush2.bf16.msra.mxu0 0
    %2843 = vmatprep.subr.bf16.mxu0 0
    %2844 = vmatpush2.bf16.msra.mxu0 0
    %2845 = vmatprep.subr.bf16.mxu0 0
    %2846 = vmatpush2.bf16.msra.mxu0 0
    %2847 = vmatprep.subr.bf16.mxu0 0
    %2848 = vmatpush2.bf16.msra.mxu0 0
    %2849 = vmatprep.subr.bf16.mxu0 0
    %2850 = vmatpush2.bf16.msra.mxu0 0
    %2851 = vmatprep.mubr.bf16.mxu0 0
    %2852 = vmatmul.mubr.bf16.gmra.mxu0 %v2711
    %v2853 = vpop.f32.mrf.mxu0
    %v2854 = vadd.f32 %v2814, %v2853
    %v2855 = vpop.f32.mrf.mxu0
    %v2856 = vpop.f32.mrf.mxu0
    %v2857 = vpop.f32.mrf.mxu0
    %2858 = vdwg.mxu0
    %v2859 = vrcp.pop %v2854
    %v2860 = vmul.f32 %v2710, %v2859
    %2861 = vst [vmem:[#allocation11] sm:$0xff] %v2860
    // Predicated region
    $region46: #{tpu_custom_call.1} parent=1 // pred_check
      _
    $region47: #{tpu_custom_call.1} parent=1 // pred_check_branch
      %2863 = sbr.rel (0) target = $region49
    $region48: #{tpu_custom_call.1} parent=1 // pred_region
      %s2865 = ssub.s32 128, 128
      %2866 = vsyncadd [#allocation4], %s2865
      %s2868 = sshll.u32 [#allocation11], 4
      %s2869 = int_to_ptr.vmem [resolvable:$true] %s2868
      %2871 = dma.vmem_to_hbm [thread:$0]  %s2869, 128, %s6, [#allocation4]
    $region49: #{tpu_custom_call.1} parent=1 // pred_fallthru
      _
    // Predicated region
    $region50: #{tpu_custom_call.1} parent=1 // pred_check
      _
    $region51: #{tpu_custom_call.1} parent=1 // pred_check_branch
      %2873 = sbr.rel (0) target = $region53
    $region52: #{tpu_custom_call.1} parent=1 // pred_region
      %2874 = dma.done [#allocation4], 128
    $region53: #{tpu_custom_call.1} parent=1 // pred_fallthru
      _
    %2875 = vsyncpa [#allocation3], 1
    %2876 = vsyncpa [#allocation6], 1
    %2877 = vsyncpa [#allocation9], 1
    %2878 = vsyncpa [#allocation4], 1

</llo_original>
